<compile_context>
chip_gen: v6e
topology: v6e:2x2x1
jax: 0.10.0
libtpu: 0.0.40
codegen_flags: <defaults>
</compile_context>

<pallas_src>
import functools

import jax
import jax.numpy as jnp
from jax.experimental import pallas as pl
from jax.experimental.pallas import tpu as pltpu


def _round_up(x, m):
    return ((x + m - 1) // m) * m


def _generation_defaults():
    """(max point tile, scoped vmem limit) per TPU generation."""
    try:
        kind = jax.devices()[0].device_kind.lower()
    except Exception:
        kind = ""
    if "v6" in kind:
        return 4096, 64 * 1024 * 1024          # 128 MiB VMEM
    if "v5" in kind:
        return 1024, 48 * 1024 * 1024          # raise the 16 MiB scoped default
    if "v7" in kind:
        return 2048, 28 * 1024 * 1024          # 64 MiB VMEM per TensorCore
    return 1024, 28 * 1024 * 1024              # unknown / future: conservative


def _stn_kernel(x_ref,
                w1_ref, b1_ref,
                w2_ref, b2_ref,
                w3_ref,
                out_ref,
                *, n_points, tile_n, compute_dtype):
    n = pl.program_id(1)
    n_chunks = pl.num_programs(1)

    # conv3 bias/ReLU are deferred to the host-side head, so the running max
    # is over raw matmul outputs and its identity element is -inf.
    @pl.when(n == 0)
    def _():
        out_ref[...] = jnp.full(out_ref.shape, -jnp.inf, dtype=out_ref.dtype)

    # ---- shared MLP: 1x1 convs as 2-D (TN, Cin) @ (Cin, Cout) MXU matmuls --
    x = x_ref[...]                                              # (TN, k) bf16
    h = jnp.dot(x, w1_ref[...], preferred_element_type=jnp.float32)
    h = jnp.maximum(h + b1_ref[...], 0.0)                       # (TN, 64)  f32

    h = jnp.dot(h.astype(compute_dtype), w2_ref[...],
                preferred_element_type=jnp.float32)
    h = jnp.maximum(h + b2_ref[...], 0.0)                       # (TN, 128) f32

    # conv3: raw matmul only (bias + ReLU are monotone per channel, so they
    # commute with the max over points and run once in the head).
    z = jnp.dot(h.astype(compute_dtype), w3_ref[...],
                preferred_element_type=jnp.float32)             # (TN, 1024) f32
    c3 = z.shape[-1]

    def accumulate(zz):
        # (TN, C) -> (TN//8, 8, C) is a vreg-layout no-op; reducing the
        # leading axis is pure VALU work (no per-chunk cross-sublane XLU).
        part = jnp.max(zz.reshape(tile_n // 8, 8, c3), axis=0)  # (8, C)
        out_ref[...] = jnp.maximum(out_ref[...], part)

    rem = n_points % tile_n
    if rem != 0:
        # Padded rows only ever exist in the very last chunk; gate the mask
        # there so every other chunk pays zero masking cost.
        @pl.when(n != n_chunks - 1)
        def _():
            accumulate(z)

        @pl.when(n == n_chunks - 1)
        def _():
            rows = jax.lax.broadcasted_iota(jnp.int32, (tile_n, 1), 0)
            accumulate(jnp.where(rows < rem, z, -jnp.inf))
    else:
        accumulate(z)


def _fold_bn(w, conv_bias, gamma, beta, mean, var, eps=1e-5):
    """Fold eval-mode BN into the preceding (C_in, C_out) weight and bias."""
    scale = gamma / jnp.sqrt(var + eps)                 # (C_out,)
    w_folded = w * scale[None, :]
    b_folded = (conv_bias - mean) * scale + beta
    return w_folded, b_folded[None, :]


def stnkd_forward(x, params, k, *, tile_n=None, compute_dtype=jnp.bfloat16):
    """x: (B, k, N) float32, channels-first like the torch Conv1d input."""
    B, kk, N = x.shape
    assert kk == k

    tile_max, vmem_limit = _generation_defaults()
    if tile_n is not None:
        tile_max = max(128, _round_up(int(tile_n), 128))

    # Pick a 128-aligned point tile and balance chunk sizes so the last chunk
    # is not mostly zero padding (e.g. N=1200, max 1024 -> two 640-row chunks).
    n_aligned = _round_up(N, 128)
    if n_aligned <= tile_max:
        tile = n_aligned
    else:
        n_chunks_target = -(-n_aligned // tile_max)
        tile = min(_round_up(-(-n_aligned // n_chunks_target), 128), tile_max)
    n_pad = _round_up(N, tile)
    n_chunks = n_pad // tile

    # Channels-last so every 1x1 conv is a lane-friendly 2-D matmul.
    xt = jnp.transpose(x, (0, 2, 1)).astype(jnp.float32)        # (B, N, k)
    if n_pad != N:
        xt = jnp.pad(xt, ((0, 0), (0, n_pad - N), (0, 0)))

    # Fold eval-mode BN into weights/biases; fold +identity into fc3 bias.
    # TODO(synk): training-mode BatchNorm (batch statistics) is not implemented.
    w1, b1 = _fold_bn(params['w1'], params['cb1'], *params['bn1'])
    w2, b2 = _fold_bn(params['w2'], params['cb2'], *params['bn2'])
    w3, b3 = _fold_bn(params['w3'], params['cb3'], *params['bn3'])
    fw1, b4 = _fold_bn(params['fw1'], params['fb1'], *params['bn4'])
    fw2, b5 = _fold_bn(params['fw2'], params['fb2'], *params['bn5'])
    fw3 = params['fw3']
    fb3 = (params['fb3'] + jnp.eye(k, dtype=jnp.float32).reshape(-1))[None, :]

    cd = compute_dtype
    c3 = w3.shape[1]                                            # 1024
    args = (xt.astype(cd),
            w1.astype(cd), b1,
            w2.astype(cd), b2,
            w3.astype(cd))

    # x streams per (batch, chunk); conv weights/biases have constant block
    # indices so they stay VMEM-resident across the whole grid.
    x_spec = pl.BlockSpec((None, tile, k), lambda b, n: (b, n, 0))
    const_specs = [pl.BlockSpec(a.shape, lambda b, n: (0, 0)) for a in args[1:]]

    kernel = functools.partial(_stn_kernel, n_points=N, tile_n=tile,
                               compute_dtype=cd)

    # Kernel output: per-batch (8, 1024) sublane-partial running max of the
    # raw conv3 output (resident accumulator across the chunk axis).
    z8 = pl.pallas_call(
        kernel,
        out_shape=jax.ShapeDtypeStruct((B, 8, c3), jnp.float32),
        grid_spec=pltpu.PrefetchScalarGridSpec(
            num_scalar_prefetch=0,
            grid=(B, n_chunks),
            in_specs=[x_spec] + const_specs,
            out_specs=pl.BlockSpec((None, 8, c3), lambda b, n: (b, 0, 0)),
            scratch_shapes=[]),
        compiler_params=pltpu.CompilerParams(
            dimension_semantics=("parallel", "arbitrary"),
            vmem_limit_bytes=vmem_limit),
    )(*args)

    # Small FC head, batched over B as plain XLA matmuls (three M=1 matmuls
    # per batch element inside the kernel would leave the MXU nearly empty and
    # pin fc weights in VMEM).  Deferred conv3 bias/ReLU is applied here.
    zmax = jnp.max(z8, axis=1)                                  # (B, 1024)
    g = jnp.maximum(zmax + b3, 0.0)
    f = jnp.maximum(g @ fw1 + b4, 0.0)                          # (B, 512)
    f = jnp.maximum(f @ fw2 + b5, 0.0)                          # (B, 256)
    f = f @ fw3 + fb3                                           # (B, k*k)
    return f.reshape(B, k, k)


def stnkd_reference(x, params, k):
    """Pure-JAX f32 reference mirroring the torch forward (eval-mode BN)."""
    def bn(h, gamma, beta, mean, var, eps=1e-5):
        return (h - mean) * (gamma / jnp.sqrt(var + eps)) + beta

    xt = jnp.transpose(x, (0, 2, 1)).astype(jnp.float32)        # (B, N, k)
    h = jax.nn.relu(bn(jnp.einsum('bnk,kc->bnc', xt, params['w1'])
                       + params['cb1'], *params['bn1']))
    h = jax.nn.relu(bn(jnp.einsum('bnk,kc->bnc', h, params['w2'])
                       + params['cb2'], *params['bn2']))
    h = jax.nn.relu(bn(jnp.einsum('bnk,kc->bnc', h, params['w3'])
                       + params['cb3'], *params['bn3']))
    g = jnp.max(h, axis=1)
    f = jax.nn.relu(bn(g @ params['fw1'] + params['fb1'], *params['bn4']))
    f = jax.nn.relu(bn(f @ params['fw2'] + params['fb2'], *params['bn5']))
    f = f @ params['fw3'] + params['fb3'][None, :]
    f = f + jnp.eye(k, dtype=jnp.float32).reshape(1, -1)
    return f.reshape(-1, k, k)


def init_params(key, k):
    ks = jax.random.split(key, 32)
    i = iter(range(32))

    def w(shape, scale=0.05):
        return scale * jax.random.normal(ks[next(i)], shape, jnp.float32)

    def bn(c):
        gamma = 1.0 + 0.1 * jax.random.normal(ks[next(i)], (c,), jnp.float32)
        beta = 0.1 * jax.random.normal(ks[next(i)], (c,), jnp.float32)
        mean = 0.05 * jax.random.normal(ks[next(i)], (c,), jnp.float32)
        var = 1.0 + 0.1 * jax.random.uniform(ks[next(i)], (c,), jnp.float32)
        return gamma, beta, mean, var

    p = {}
    p['w1'], p['cb1'] = w((k, 64)), w((64,))
    p['bn1'] = bn(64)
    p['w2'], p['cb2'] = w((64, 128)), w((128,))
    p['bn2'] = bn(128)
    p['w3'], p['cb3'] = w((128, 1024)), w((1024,))
    p['bn3'] = bn(1024)
    p['fw1'], p['fb1'] = w((1024, 512)), w((512,))
    p['bn4'] = bn(512)
    p['fw2'], p['fb2'] = w((512, 256)), w((256,))
    p['bn5'] = bn(256)
    p['fw3'], p['fb3'] = w((256, k * k)), w((k * k,))
    return p


if __name__ == "__main__":
    key = jax.random.PRNGKey(0)
    kx, kp, kx2 = jax.random.split(key, 3)

    B, K, N = 2, 16, 256            # small: batch=2, k=16 channels, 256 points
    x = jax.random.normal(kx, (B, K, N), jnp.float32)
    params = init_params(kp, K)
    ref = stnkd_reference(x, params, K)

    # Multi-chunk path (two 128-point chunks, no padding).
    out = jax.block_until_ready(stnkd_forward(x, params, K, tile_n=128))
    assert out.shape == (B, K, K)
    assert jnp.allclose(out, ref, atol=2e-2, rtol=2e-2), (
        f"mismatch vs reference: max abs err {jnp.max(jnp.abs(out - ref))}")

    # Ragged case: N not a multiple of the point tile (exercises -inf masking).
    N2 = 200
    x2 = jax.random.normal(kx2, (B, K, N2), jnp.float32)
    out2 = jax.block_until_ready(stnkd_forward(x2, params, K, tile_n=128))
    ref2 = stnkd_reference(x2, params, K)
    assert jnp.allclose(out2, ref2, atol=2e-2, rtol=2e-2), (
        f"mismatch (ragged) vs reference: {jnp.max(jnp.abs(out2 - ref2))}")

    # Default generation-aware tiling (single chunk here).
    out3 = jax.block_until_ready(stnkd_forward(x, params, K))
    assert jnp.allclose(out3, ref, atol=2e-2, rtol=2e-2), (
        f"mismatch (default tile) vs reference: {jnp.max(jnp.abs(out3 - ref))}")

    print("KERNEL_OK")
</pallas_src>

<mosaic_0001>
module attributes {stable_mosaic.version = 11 : i64} {
  func.func @_stn_kernel(%arg0: i32, %arg1: i32, %arg2: memref<1x128x16xbf16, #tpu.memory_space<vmem>>, %arg3: memref<16x64xbf16, #tpu.memory_space<vmem>>, %arg4: memref<1x64xf32, #tpu.memory_space<vmem>>, %arg5: memref<64x128xbf16, #tpu.memory_space<vmem>>, %arg6: memref<1x128xf32, #tpu.memory_space<vmem>>, %arg7: memref<128x1024xbf16, #tpu.memory_space<vmem>>, %arg8: memref<1x8x1024xf32, #tpu.memory_space<vmem>>) attributes {dimension_semantics = [#tpu.dimension_semantics<parallel>, #tpu.dimension_semantics<arbitrary>], iteration_bounds = array<i64: 2, 2>, scalar_prefetch = 0 : i64, scratch_operands = 0 : i64, tpu.core_type = #tpu.core_type<tc>, window_params = [{transform_indices = @transform_0, window_bounds = array<i64: 1, 128, 16>}, {pipeline_mode = #tpu.pipeline_mode<synchronous>, transform_indices = @transform_1, window_bounds = array<i64: 16, 64>}, {pipeline_mode = #tpu.pipeline_mode<synchronous>, transform_indices = @transform_2, window_bounds = array<i64: 1, 64>}, {pipeline_mode = #tpu.pipeline_mode<synchronous>, transform_indices = @transform_3, window_bounds = array<i64: 64, 128>}, {pipeline_mode = #tpu.pipeline_mode<synchronous>, transform_indices = @transform_4, window_bounds = array<i64: 1, 128>}, {pipeline_mode = #tpu.pipeline_mode<synchronous>, transform_indices = @transform_5, window_bounds = array<i64: 128, 1024>}, {transform_indices = @transform_6, window_bounds = array<i64: 1, 8, 1024>}]} {
    %c0_i32 = arith.constant 0 : i32
    %0 = arith.cmpi eq, %arg1, %c0_i32 : i32
    %1 = arith.extui %0 : i1 to i32
    %c0_i32_0 = arith.constant 0 : i32
    %2 = arith.cmpi ne, %1, %c0_i32_0 : i32
    scf.if %2 {
      %cst_24 = arith.constant 0xFF800000 : f32
      %31 = vector.broadcast %cst_24 : f32 to vector<8x1024xf32>
      %c0_25 = arith.constant 0 : index
      %c0_26 = arith.constant 0 : index
      %c0_27 = arith.constant 0 : index
      %32 = vector.load %arg8[%c0_25, %c0_26, %c0_27] : memref<1x8x1024xf32, #tpu.memory_space<vmem>>, vector<1x8x1024xf32>
      %33 = vector.shape_cast %32 : vector<1x8x1024xf32> to vector<8x1024xf32>
      %34 = vector.shape_cast %31 : vector<8x1024xf32> to vector<1x8x1024xf32>
      tpu.vector_store %arg8[%c0_25, %c0_26, %c0_27], %34 {strides = array<i32>} : memref<1x8x1024xf32, #tpu.memory_space<vmem>>, vector<1x8x1024xf32>,
    } else {
    }
    %c0 = arith.constant 0 : index
    %c0_1 = arith.constant 0 : index
    %c0_2 = arith.constant 0 : index
    %3 = vector.load %arg2[%c0, %c0_1, %c0_2] : memref<1x128x16xbf16, #tpu.memory_space<vmem>>, vector<1x128x16xbf16>
    %4 = vector.shape_cast %3 : vector<1x128x16xbf16> to vector<128x16xbf16>
    %c0_3 = arith.constant 0 : index
    %c0_4 = arith.constant 0 : index
    %5 = vector.load %arg3[%c0_3, %c0_4] : memref<16x64xbf16, #tpu.memory_space<vmem>>, vector<16x64xbf16>
    %cst = arith.constant dense<0.000000e+00> : vector<128x64xf32>
    %6 = tpu.matmul %4, %5, %cst {dimension_numbers = #tpu.dot_dimension_numbers<[1], [0], [0], [1], [0, 0, 1, 1], [], []>} : vector<128x16xbf16>, vector<16x64xbf16>, vector<128x64xf32> -> vector<128x64xf32>
    %c0_5 = arith.constant 0 : index
    %c0_6 = arith.constant 0 : index
    %7 = vector.load %arg4[%c0_5, %c0_6] : memref<1x64xf32, #tpu.memory_space<vmem>>, vector<1x64xf32>
    %8 = vector.broadcast %7 : vector<1x64xf32> to vector<128x64xf32>
    %9 = arith.addf %6, %8 : vector<128x64xf32>
    %cst_7 = arith.constant 0.000000e+00 : f32
    %10 = vector.broadcast %cst_7 : f32 to vector<128x64xf32>
    %11 = arith.maximumf %9, %10 : vector<128x64xf32>
    %12 = arith.truncf %11 : vector<128x64xf32> to vector<128x64xbf16>
    %c0_8 = arith.constant 0 : index
    %c0_9 = arith.constant 0 : index
    %13 = vector.load %arg5[%c0_8, %c0_9] : memref<64x128xbf16, #tpu.memory_space<vmem>>, vector<64x128xbf16>
    %cst_10 = arith.constant dense<0.000000e+00> : vector<128x128xf32>
    %14 = tpu.matmul %12, %13, %cst_10 {dimension_numbers = #tpu.dot_dimension_numbers<[1], [0], [0], [1], [0, 0, 1, 1], [], []>} : vector<128x64xbf16>, vector<64x128xbf16>, vector<128x128xf32> -> vector<128x128xf32>
    %c0_11 = arith.constant 0 : index
    %c0_12 = arith.constant 0 : index
    %15 = vector.load %arg6[%c0_11, %c0_12] : memref<1x128xf32, #tpu.memory_space<vmem>>, vector<1x128xf32>
    %16 = vector.broadcast %15 : vector<1x128xf32> to vector<128x128xf32>
    %17 = arith.addf %14, %16 : vector<128x128xf32>
    %cst_13 = arith.constant 0.000000e+00 : f32
    %18 = vector.broadcast %cst_13 : f32 to vector<128x128xf32>
    %19 = arith.maximumf %17, %18 : vector<128x128xf32>
    %20 = arith.truncf %19 : vector<128x128xf32> to vector<128x128xbf16>
    %c0_14 = arith.constant 0 : index
    %c0_15 = arith.constant 0 : index
    %21 = vector.load %arg7[%c0_14, %c0_15] : memref<128x1024xbf16, #tpu.memory_space<vmem>>, vector<128x1024xbf16>
    %cst_16 = arith.constant dense<0.000000e+00> : vector<128x1024xf32>
    %22 = tpu.matmul %20, %21, %cst_16 {dimension_numbers = #tpu.dot_dimension_numbers<[1], [0], [0], [1], [0, 0, 1, 1], [], []>} : vector<128x128xbf16>, vector<128x1024xbf16>, vector<128x1024xf32> -> vector<128x1024xf32>
    %23 = vector.shape_cast %22 : vector<128x1024xf32> to vector<16x8x1024xf32>
    %cst_17 = arith.constant dense<0xFF800000> : vector<8x1024xf32>
    %24 = vector.multi_reduction <maximumf>, %23, %cst_17 [0] : vector<16x8x1024xf32> to vector<8x1024xf32>
    %c0_18 = arith.constant 0 : index
    %c0_19 = arith.constant 0 : index
    %c0_20 = arith.constant 0 : index
    %25 = vector.load %arg8[%c0_18, %c0_19, %c0_20] : memref<1x8x1024xf32, #tpu.memory_space<vmem>>, vector<1x8x1024xf32>
    %26 = vector.shape_cast %25 : vector<1x8x1024xf32> to vector<8x1024xf32>
    %27 = arith.maximumf %26, %24 : vector<8x1024xf32>
    %c0_21 = arith.constant 0 : index
    %c0_22 = arith.constant 0 : index
    %c0_23 = arith.constant 0 : index
    %28 = vector.load %arg8[%c0_21, %c0_22, %c0_23] : memref<1x8x1024xf32, #tpu.memory_space<vmem>>, vector<1x8x1024xf32>
    %29 = vector.shape_cast %28 : vector<1x8x1024xf32> to vector<8x1024xf32>
    %30 = vector.shape_cast %27 : vector<8x1024xf32> to vector<1x8x1024xf32>
    tpu.vector_store %arg8[%c0_21, %c0_22, %c0_23], %30 {strides = array<i32>} : memref<1x8x1024xf32, #tpu.memory_space<vmem>>, vector<1x8x1024xf32>,
    return
  }
  func.func @transform_0(%arg0: i32, %arg1: i32) -> (i32, i32, i32) {
    %c0_i32 = arith.constant 0 : i32
    %c0_i32_0 = arith.constant 0 : i32
    return %arg0, %arg1, %c0_i32 : i32, i32, i32
  }
  func.func @transform_1(%arg0: i32, %arg1: i32) -> (i32, i32) {
    %c0_i32 = arith.constant 0 : i32
    %c0_i32_0 = arith.constant 0 : i32
    %c0_i32_1 = arith.constant 0 : i32
    return %c0_i32, %c0_i32_0 : i32, i32
  }
  func.func @transform_2(%arg0: i32, %arg1: i32) -> (i32, i32) {
    %c0_i32 = arith.constant 0 : i32
    %c0_i32_0 = arith.constant 0 : i32
    %c0_i32_1 = arith.constant 0 : i32
    return %c0_i32, %c0_i32_0 : i32, i32
  }
  func.func @transform_3(%arg0: i32, %arg1: i32) -> (i32, i32) {
    %c0_i32 = arith.constant 0 : i32
    %c0_i32_0 = arith.constant 0 : i32
    %c0_i32_1 = arith.constant 0 : i32
    return %c0_i32, %c0_i32_0 : i32, i32
  }
  func.func @transform_4(%arg0: i32, %arg1: i32) -> (i32, i32) {
    %c0_i32 = arith.constant 0 : i32
    %c0_i32_0 = arith.constant 0 : i32
    %c0_i32_1 = arith.constant 0 : i32
    return %c0_i32, %c0_i32_0 : i32, i32
  }
  func.func @transform_5(%arg0: i32, %arg1: i32) -> (i32, i32) {
    %c0_i32 = arith.constant 0 : i32
    %c0_i32_0 = arith.constant 0 : i32
    %c0_i32_1 = arith.constant 0 : i32
    return %c0_i32, %c0_i32_0 : i32, i32
  }
  func.func @transform_6(%arg0: i32, %arg1: i32) -> (i32, i32, i32) {
    %c0_i32 = arith.constant 0 : i32
    %c0_i32_0 = arith.constant 0 : i32
    %c0_i32_1 = arith.constant 0 : i32
    return %arg0, %c0_i32, %c0_i32_0 : i32, i32, i32
  }
}

</mosaic_0001>

<llo_original>
// kernel: tpu_custom_call.1
$region0: #{tpu_custom_call.1}
  #allocation0 [shape = 'u32[]', space=smem, size = 0x4, offset = 0x4, fixed_abs, tag = 'smem constant byte address 0x4 - core index']
  #allocation1 [shape = 'u32[144,128]{1,0:T(1,128)}', space=vmem, size = 0x12000, scoped, tag = 'internal scratch']
  %s0 = inlined_call_operand.vmem [shape: bf16[2,256,16], index: 0, kind: input, shape index: {}]
  %s1 = inlined_call_operand.vmem [shape: bf16[16,64], index: 1, kind: input, shape index: {}]
  %s2 = inlined_call_operand.vmem [shape: f32[1,64], index: 2, kind: input, shape index: {}]
  %s3 = inlined_call_operand.vmem [shape: bf16[64,128], index: 3, kind: input, shape index: {}]
  %s4 = inlined_call_operand.vmem [shape: f32[1,128], index: 4, kind: input, shape index: {}]
  %s5 = inlined_call_operand.hbm [shape: bf16[128,1024], index: 5, kind: input, shape index: {}]
  %s6 = inlined_call_operand.hbm [shape: f32[2,8,1024], index: 6, kind: output, shape index: {}]
  %s7 = sld [smem:[#allocation0]]
  $region65: #{tpu_custom_call.1} parent=0
    _
  %s9 = ssub.s32 1, %s7
  %s10 = scalar_select 0, %s9, %s7
  $region1: #{tpu_custom_call.1} parent=0
    #allocation2 [shape = 'u8[262144]{0}', space=vmem, size = 0x40000, scoped, tag = 'input window, operand 5, single buffered']
    #allocation3 [shape = 's32[2]{0}', space=sflag, size = 0x8, scoped, tag = 'scoped memory for tpu_custom_call.1']
    #allocation4 [shape = 's32[2]{0}', space=sflag, size = 0x8, scoped, tag = 'scoped memory for tpu_custom_call.1']
    #allocation5 [shape = 'u8[65536]{0}', space=vmem, size = 0x10000, scoped, tag = 'output window, operand 0']
    %11 = vsyncpa [#allocation3], 0
    %12 = vsyncpa [#allocation4], 0
    %s13 = scalar_lea.sflag [#allocation4], 1
    %14 = vsyncpa %s13, 0
    loop: start=0, step=1, limit=6
    $region2: #{tpu_custom_call.1} parent=1 // loop_pre_header
      _
    $region3: #{tpu_custom_call.1} parent=1 // loop_header
      %s16 = sphi 0, %s20
      %p17 = scmp.ge.s32.totalorder %s16, 6
      %s23 = sphi 0, %s35
      %s24 = sphi 0, %s31
      %s25 = sphi 0, %s23
      %s26 = sphi 0, %s24
      %s27 = sphi 0, %s25
      %s28 = sphi 0, %s26
      %s40 = sphi 0, %s42
      %s43 = sphi 0, %s40
      %s44 = sphi 0, %s43
      %s60 = sphi 0, %s44
      %s64 = sphi 0, %s64
      %s66 = sphi 0, %s64
      %s67 = sphi 0, %s66
      %s81 = sphi 0, %s67
      %s85 = sphi 0, %s85
      %s87 = sphi 0, %s85
      %s88 = sphi 0, %s87
      %s102 = sphi 0, %s88
      %s106 = sphi 0, %s106
      %s108 = sphi 0, %s106
      %s109 = sphi 0, %s108
      %s123 = sphi 0, %s109
      %s127 = sphi 0, %s127
      %s129 = sphi 0, %s127
      %s130 = sphi 0, %s129
      %s144 = sphi 0, %s130
      %s148 = sphi 0, %s148
      %s150 = sphi 0, %s148
      %s151 = sphi 0, %s150
      %s165 = sphi 0, %s151
      %s171 = sphi 0, %s173
      %s174 = sphi 0, %s171
      %s175 = sphi 0, %s174
      %s191 = sphi 0, %s175
    $region4: #{tpu_custom_call.1} parent=1 // loop_header_branch
      %19 = sbr.rel (%p17) target = $region8
    $region5: #{tpu_custom_call.1} parent=1 // loop_body
      %s21 = ssub.s32 %s16, 1
      %s22 = ssub.s32 %s16, 2
      %s29 = sadd.s32 1, %s24
      %p30 = scmp.ge.s32.totalorder %s29, 2
      %s31 = scalar_select %p30, 0, %s29
      %s32 = sadd.s32 1, %s23
      %s33 = scalar_select %p30, %s32, %s23
      %p34 = scmp.ge.s32.totalorder %s33, 2
      %s35 = scalar_select %p34, 0, %s33
      %s36 = ssub.s32 %s23, %s35
      %s37 = ssub.s32 %s24, %s31
      %s38 = sor.u32 %s36, %s37
      %p39 = scmp.eq.s32.totalorder %s38, 0
      %s41 = sadd.s32 %s40, 1
      %s42 = scalar_select %p39, %s40, %s41
      %p45 = pneg %p39
      %p46 = scmp.eq.s32.totalorder %s16, 3
      %p47 = por %p45, %p46
      %p48 = scmp.ne.s32.totalorder %s40, %s43
      %p49 = scmp.eq.s32.totalorder %s16, 0
      %p50 = por %p48, %p49
      %p51 = scmp.ne.s32.totalorder %s40, %s43
      %p52 = scmp.eq.s32.totalorder %s21, 3
      %p53 = por %p51, %p52
      %p54 = scmp.ne.s32.totalorder %s43, %s44
      %p55 = scmp.eq.s32.totalorder %s21, 0
      %p56 = por %p54, %p55
      %p57 = scmp.ne.s32.totalorder %s43, %s44
      %p58 = scmp.eq.s32.totalorder %s22, 3
      %p59 = por %p57, %p58
      %p61 = scmp.ne.s32.totalorder %s44, %s60
      %p62 = scmp.eq.s32.totalorder %s22, 0
      %p63 = por %p61, %p62
      %s65 = sadd.s32 %s64, 1
      %p68 = scmp.eq.s32.totalorder %s16, 3
      %p69 = scmp.ne.s32.totalorder %s64, %s66
      %p70 = scmp.eq.s32.totalorder %s16, 0
      %p71 = por %p69, %p70
      %p72 = scmp.ne.s32.totalorder %s64, %s66
      %p73 = scmp.eq.s32.totalorder %s21, 3
      %p74 = por %p72, %p73
      %p75 = scmp.ne.s32.totalorder %s66, %s67
      %p76 = scmp.eq.s32.totalorder %s21, 0
      %p77 = por %p75, %p76
      %p78 = scmp.ne.s32.totalorder %s66, %s67
      %p79 = scmp.eq.s32.totalorder %s22, 3
      %p80 = por %p78, %p79
      %p82 = scmp.ne.s32.totalorder %s67, %s81
      %p83 = scmp.eq.s32.totalorder %s22, 0
      %p84 = por %p82, %p83
      %s86 = sadd.s32 %s85, 1
      %p89 = scmp.eq.s32.totalorder %s16, 3
      %p90 = scmp.ne.s32.totalorder %s85, %s87
      %p91 = scmp.eq.s32.totalorder %s16, 0
      %p92 = por %p90, %p91
      %p93 = scmp.ne.s32.totalorder %s85, %s87
      %p94 = scmp.eq.s32.totalorder %s21, 3
      %p95 = por %p93, %p94
      %p96 = scmp.ne.s32.totalorder %s87, %s88
      %p97 = scmp.eq.s32.totalorder %s21, 0
      %p98 = por %p96, %p97
      %p99 = scmp.ne.s32.totalorder %s87, %s88
      %p100 = scmp.eq.s32.totalorder %s22, 3
      %p101 = por %p99, %p100
      %p103 = scmp.ne.s32.totalorder %s88, %s102
      %p104 = scmp.eq.s32.totalorder %s22, 0
      %p105 = por %p103, %p104
      %s107 = sadd.s32 %s106, 1
      %p110 = scmp.eq.s32.totalorder %s16, 3
      %p111 = scmp.ne.s32.totalorder %s106, %s108
      %p112 = scmp.eq.s32.totalorder %s16, 0
      %p113 = por %p111, %p112
      %p114 = scmp.ne.s32.totalorder %s106, %s108
      %p115 = scmp.eq.s32.totalorder %s21, 3
      %p116 = por %p114, %p115
      %p117 = scmp.ne.s32.totalorder %s108, %s109
      %p118 = scmp.eq.s32.totalorder %s21, 0
      %p119 = por %p117, %p118
      %p120 = scmp.ne.s32.totalorder %s108, %s109
      %p121 = scmp.eq.s32.totalorder %s22, 3
      %p122 = por %p120, %p121
      %p124 = scmp.ne.s32.totalorder %s109, %s123
      %p125 = scmp.eq.s32.totalorder %s22, 0
      %p126 = por %p124, %p125
      %s128 = sadd.s32 %s127, 1
      %p131 = scmp.eq.s32.totalorder %s16, 3
      %p132 = scmp.ne.s32.totalorder %s127, %s129
      %p133 = scmp.eq.s32.totalorder %s16, 0
      %p134 = por %p132, %p133
      %p135 = scmp.ne.s32.totalorder %s127, %s129
      %p136 = scmp.eq.s32.totalorder %s21, 3
      %p137 = por %p135, %p136
      %p138 = scmp.ne.s32.totalorder %s129, %s130
      %p139 = scmp.eq.s32.totalorder %s21, 0
      %p140 = por %p138, %p139
      %p141 = scmp.ne.s32.totalorder %s129, %s130
      %p142 = scmp.eq.s32.totalorder %s22, 3
      %p143 = por %p141, %p142
      %p145 = scmp.ne.s32.totalorder %s130, %s144
      %p146 = scmp.eq.s32.totalorder %s22, 0
      %p147 = por %p145, %p146
      %s149 = sadd.s32 %s148, 1
      %p152 = scmp.eq.s32.totalorder %s16, 3
      %p153 = scmp.ne.s32.totalorder %s148, %s150
      %p154 = scmp.eq.s32.totalorder %s16, 0
      %p155 = por %p153, %p154
      %p156 = scmp.ne.s32.totalorder %s148, %s150
      %p157 = scmp.eq.s32.totalorder %s21, 3
      %p158 = por %p156, %p157
      %p159 = scmp.ne.s32.totalorder %s150, %s151
      %p160 = scmp.eq.s32.totalorder %s21, 0
      %p161 = por %p159, %p160
      %p162 = scmp.ne.s32.totalorder %s150, %s151
      %p163 = scmp.eq.s32.totalorder %s22, 3
      %p164 = por %p162, %p163
      %p166 = scmp.ne.s32.totalorder %s151, %s165
      %p167 = scmp.eq.s32.totalorder %s22, 0
      %p168 = por %p166, %p167
      %s169 = ssub.s32 %s23, %s35
      %p170 = scmp.eq.s32.totalorder %s169, 0
      %s172 = sadd.s32 %s171, 1
      %s173 = scalar_select %p170, %s171, %s172
      %p176 = pneg %p170
      %p177 = scmp.eq.s32.totalorder %s16, 3
      %p178 = por %p176, %p177
      %p179 = scmp.ne.s32.totalorder %s171, %s174
      %p180 = scmp.eq.s32.totalorder %s16, 0
      %p181 = por %p179, %p180
      %p182 = scmp.ne.s32.totalorder %s171, %s174
      %p183 = scmp.eq.s32.totalorder %s21, 3
      %p184 = por %p182, %p183
      %p185 = scmp.ne.s32.totalorder %s174, %s175
      %p186 = scmp.eq.s32.totalorder %s21, 0
      %p187 = por %p185, %p186
      %p188 = scmp.ne.s32.totalorder %s174, %s175
      %p189 = scmp.eq.s32.totalorder %s22, 3
      %p190 = por %p188, %p189
      %p192 = scmp.ne.s32.totalorder %s175, %s191
      %p193 = scmp.eq.s32.totalorder %s22, 0
      %p194 = por %p192, %p193
      %p195 = scmp.le.s32.totalorder 1, %s16
      %p196 = scmp.lt.s32.totalorder %s16, 5
      %p197 = pnand %p195, %p196
      %p198 = pneg %p197
      // Predicated region
      $region9: #{tpu_custom_call.1} parent=5 // pred_check
        _
      $region10: #{tpu_custom_call.1} parent=5 // pred_check_branch
        %200 = sbr.rel (%p197) target = $region12
      $region11: #{tpu_custom_call.1} parent=5 // pred_region
        %s201 = ssub.s32 %s16, 1
        // Predicated region
        $region13: #{tpu_custom_call.1} parent=11 // pred_check
          %p202 = pneg %p77
        $region14: #{tpu_custom_call.1} parent=11 // pred_check_branch
          %204 = sbr.rel (%p202) target = $region16
        $region15: #{tpu_custom_call.1} parent=11 // pred_region
          _
        $region16: #{tpu_custom_call.1} parent=11 // pred_fallthru
          _
        // Predicated region
        $region17: #{tpu_custom_call.1} parent=11 // pred_check
          %p205 = pneg %p98
        $region18: #{tpu_custom_call.1} parent=11 // pred_check_branch
          %207 = sbr.rel (%p205) target = $region20
        $region19: #{tpu_custom_call.1} parent=11 // pred_region
          _
        $region20: #{tpu_custom_call.1} parent=11 // pred_fallthru
          _
        // Predicated region
        $region21: #{tpu_custom_call.1} parent=11 // pred_check
          %p208 = pneg %p119
        $region22: #{tpu_custom_call.1} parent=11 // pred_check_branch
          %210 = sbr.rel (%p208) target = $region24
        $region23: #{tpu_custom_call.1} parent=11 // pred_region
          _
        $region24: #{tpu_custom_call.1} parent=11 // pred_fallthru
          _
        // Predicated region
        $region25: #{tpu_custom_call.1} parent=11 // pred_check
          %p211 = pneg %p140
        $region26: #{tpu_custom_call.1} parent=11 // pred_check_branch
          %213 = sbr.rel (%p211) target = $region28
        $region27: #{tpu_custom_call.1} parent=11 // pred_region
          _
        $region28: #{tpu_custom_call.1} parent=11 // pred_fallthru
          _
        // Predicated region
        $region29: #{tpu_custom_call.1} parent=11 // pred_check
          %p214 = pneg %p161
        $region30: #{tpu_custom_call.1} parent=11 // pred_check_branch
          %216 = sbr.rel (%p214) target = $region32
        $region31: #{tpu_custom_call.1} parent=11 // pred_region
          %s218 = ssub.s32 8192, 8192
          %219 = vsyncadd [#allocation3], %s218
          %s220 = sshll.u32 [#allocation2], 4
          %s221 = int_to_ptr.vmem [resolvable:$true] %s220
          %226 = dma.hbm_to_vmem [thread:$0]  %s5, 8192, %s221, [#allocation3], 512, 512, 32
        $region32: #{tpu_custom_call.1} parent=11 // pred_fallthru
          _
      $region12: #{tpu_custom_call.1} parent=5 // pred_fallthru
        _
      %p227 = scmp.lt.s32.totalorder %s16, 4
      // Predicated region
      $region33: #{tpu_custom_call.1} parent=5 // pred_check
        %p228 = pneg %p227
      $region34: #{tpu_custom_call.1} parent=5 // pred_check_branch
        %230 = sbr.rel (%p228) target = $region36
      $region35: #{tpu_custom_call.1} parent=5 // pred_region
        // Predicated region
        $region37: #{tpu_custom_call.1} parent=35 // pred_check
          %p231 = pneg %p50
        $region38: #{tpu_custom_call.1} parent=35 // pred_check_branch
          %233 = sbr.rel (%p231) target = $region40
        $region39: #{tpu_custom_call.1} parent=35 // pred_region
          %s234 = smul.u32 16, %s24
          %p235 = scmp.lt.s32.totalorder %s23, 1
          %s236 = scalar_select %p235, %s23, 1
          %p237 = scmp.lt.s32.totalorder %s234, 31
          %s238 = scalar_select %p237, %s234, 31
          %s239 = smul.addr %s236, 32
          %s240 = sadd.s32 %s238, %s239
          %s241 = smul.addr %s240, 4
          %s242 = scalar_lea.vmem %s0, %s241
          %s243 = smul.u32 16, %s24
        $region40: #{tpu_custom_call.1} parent=35 // pred_fallthru
          _
      $region36: #{tpu_custom_call.1} parent=5 // pred_fallthru
        _
      %p244 = scmp.le.s32.totalorder 1, %s16
      %p245 = scmp.lt.s32.totalorder %s16, 5
      %p246 = pnand %p244, %p245
      %p247 = pneg %p246
      // Predicated region
      $region41: #{tpu_custom_call.1} parent=5 // pred_check
        _
      $region42: #{tpu_custom_call.1} parent=5 // pred_check_branch
        %249 = sbr.rel (%p246) target = $region44
      $region43: #{tpu_custom_call.1} parent=5 // pred_region
        %s250 = ssub.s32 %s16, 1
        // Predicated region
        $region45: #{tpu_custom_call.1} parent=43 // pred_check
          %p251 = pneg %p161
        $region46: #{tpu_custom_call.1} parent=43 // pred_check_branch
          %253 = sbr.rel (%p251) target = $region48
        $region47: #{tpu_custom_call.1} parent=43 // pred_region
          %254 = dma.done [#allocation3], 8192
        $region48: #{tpu_custom_call.1} parent=43 // pred_fallthru
          _
        %s255 = smul.u32 16, %s26
        %p256 = scmp.lt.s32.totalorder %s25, 1
        %s257 = scalar_select %p256, %s25, 1
        %p258 = scmp.lt.s32.totalorder %s255, 31
        %s259 = scalar_select %p258, %s255, 31
        %s260 = smul.addr %s257, 32
        %s261 = sadd.s32 %s259, %s260
        %s262 = smul.addr %s261, 4
        %s263 = scalar_lea.vmem %s0, %s262
        %p264 = pneg %p56
        %p265 = pneg %p53
        %p266 = pneg %p77
        %p267 = pneg %p74
        %p268 = pneg %p98
        %p269 = pneg %p95
        %p270 = pneg %p119
        %p271 = pneg %p116
        %p272 = pneg %p140
        %p273 = pneg %p137
        %p274 = pneg %p161
        %p275 = pneg %p158
        %p276 = pneg %p187
        %p277 = pneg %p184
        %s278 = sand.u32 %s174, 1
        %s279 = scalar_lea.sflag [#allocation4], %s278
        %s280 = sand.u32 %s174, 1
        %s281 = smul.addr %s280, 64
        %s282 = scalar_lea.vmem [#allocation5], %s281
        %s283 = smul.u32 16, %s26
        %p284 = scmp.lt.s32.totalorder %s25, 1
        %s285 = scalar_select %p284, %s25, 1
        %p286 = scmp.lt.s32.totalorder %s283, 31
        %s287 = scalar_select %p286, %s283, 31
        %s288 = smul.addr %s285, 32
        %s289 = sadd.s32 %s287, %s288
        %s290 = smul.addr %s289, 4
        %s291 = scalar_lea.vmem %s0, %s290
        %s292 = smul.u32 16, %s26
        %p294 = scmp.eq.s32.totalorder %s26, 0
        // Predicated region
        $region49: #{tpu_custom_call.1} parent=43 // pred_check
          %p295 = pneg %p294
        $region50: #{tpu_custom_call.1} parent=43 // pred_check_branch
          %297 = sbr.rel (%p295) target = $region52
        $region51: #{tpu_custom_call.1} parent=43 // pred_region
          %298 = vst [vmem:[%s282] sm:$0xff] -inf
          %299 = vst [vmem:[%s282 + $0x8] sm:$0xff] -inf
          %300 = vst [vmem:[%s282 + $0x10] sm:$0xff] -inf
          %301 = vst [vmem:[%s282 + $0x18] sm:$0xff] -inf
          %302 = vst [vmem:[%s282 + $0x20] sm:$0xff] -inf
          %303 = vst [vmem:[%s282 + $0x28] sm:$0xff] -inf
          %304 = vst [vmem:[%s282 + $0x30] sm:$0xff] -inf
          %305 = vst [vmem:[%s282 + $0x38] sm:$0xff] -inf
        $region52: #{tpu_custom_call.1} parent=43 // pred_fallthru
          _
        %v306 = vld [vmem:[%s291] sm:$0xf]
        %v307 = vld [vmem:[%s291 + $0x4] sm:$0xf]
        %v308 = vld [vmem:[%s291 + $0x8] sm:$0xf]
        %v309 = vld [vmem:[%s291 + $0xc] sm:$0xf]
        %v310 = vld [vmem:[%s291 + $0x10] sm:$0xf]
        %v311 = vld [vmem:[%s291 + $0x14] sm:$0xf]
        %v312 = vld [vmem:[%s291 + $0x18] sm:$0xf]
        %v313 = vld [vmem:[%s291 + $0x1c] sm:$0xf]
        %v314 = vld [vmem:[%s291 + $0x20] sm:$0xf]
        %v315 = vld [vmem:[%s291 + $0x24] sm:$0xf]
        %v316 = vld [vmem:[%s291 + $0x28] sm:$0xf]
        %v317 = vld [vmem:[%s291 + $0x2c] sm:$0xf]
        %v318 = vld [vmem:[%s291 + $0x30] sm:$0xf]
        %v319 = vld [vmem:[%s291 + $0x34] sm:$0xf]
        %v320 = vld [vmem:[%s291 + $0x38] sm:$0xf]
        %v321 = vld [vmem:[%s291 + $0x3c] sm:$0xf]
        %v322 = vld [vmem:[%s1] sm:$0xf]
        %v323 = vld [vmem:[%s1 + $0x4] sm:$0xf]
        %v324 = vld [vmem:[%s2] sm:$0x1]
        %v326 = vlaneseq
        %v327 = vshrl.u32 %v326, 7
        %v328 = vsub.s32 0, %v327
        %v329 = vrot.slane %v324, %v328
        %v347 = vunpack.c.l.b16 %v306
        %v348 = vunpack.c.l.b16 %v307
        %v349 = vunpack.c.l.b16 %v308
        %v350 = vunpack.c.l.b16 %v309
        %v351 = vunpack.c.l.b16 %v310
        %v352 = vunpack.c.l.b16 %v311
        %v353 = vunpack.c.l.b16 %v312
        %v354 = vunpack.c.l.b16 %v313
        %v355 = vunpack.c.l.b16 %v314
        %v356 = vunpack.c.l.b16 %v315
        %v357 = vunpack.c.l.b16 %v316
        %v358 = vunpack.c.l.b16 %v317
        %v359 = vunpack.c.l.b16 %v318
        %v360 = vunpack.c.l.b16 %v319
        %v361 = vunpack.c.l.b16 %v320
        %v362 = vunpack.c.l.b16 %v321
        %v363 = vpack.c.b16 %v348, %v347
        %v364 = vpack.c.b16 %v350, %v349
        %v365 = vpack.c.b16 %v352, %v351
        %v366 = vpack.c.b16 %v354, %v353
        %v367 = vpack.c.b16 %v356, %v355
        %v368 = vpack.c.b16 %v358, %v357
        %v369 = vpack.c.b16 %v360, %v359
        %v370 = vpack.c.b16 %v362, %v361
        %v373 = vunpack.c.l.b16 %v322
        %v374 = vunpack.c.l.b16 %v323
        %v375 = vpack.c.b16 %v374, %v373
        %vm377 = vcmask 130048
        %v379 = vsel %vm377, %v363, 0
        %v382 = vsel %vm377, %v364, 0
        %v385 = vsel %vm377, %v365, 0
        %v388 = vsel %vm377, %v366, 0
        %v391 = vsel %vm377, %v367, 0
        %v394 = vsel %vm377, %v368, 0
        %v397 = vsel %vm377, %v369, 0
        %v400 = vsel %vm377, %v370, 0
        %402 = vmatprep.subr.bf16.mxu0 0
        %403 = vmatpush1.bf16.msra.mxu0 0
        %404 = vmatprep.subr.bf16.mxu0 0
        %405 = vmatpush1.bf16.msra.mxu0 0
        %406 = vmatprep.subr.bf16.mxu0 0
        %407 = vmatpush1.bf16.msra.mxu0 0
        %408 = vmatprep.subr.bf16.mxu0 0
        %409 = vmatpush1.bf16.msra.mxu0 0
        %410 = vmatprep.subr.bf16.mxu0 0
        %411 = vmatpush1.bf16.msra.mxu0 0
        %412 = vmatprep.subr.bf16.mxu0 0
        %413 = vmatpush1.bf16.msra.mxu0 0
        %414 = vmatprep.subr.bf16.mxu0 0
        %415 = vmatpush1.bf16.msra.mxu0 0
        %416 = vmatprep.subr.bf16.mxu0 0
        %417 = vmatpush1.bf16.msra.mxu0 %v375
        %418 = vmatprep.subr.bf16.mxu0 0
        %419 = vmatpush2.bf16.msra.mxu0 0
        %420 = vmatprep.subr.bf16.mxu0 0
        %421 = vmatpush2.bf16.msra.mxu0 0
        %422 = vmatprep.subr.bf16.mxu0 0
        %423 = vmatpush2.bf16.msra.mxu0 0
        %424 = vmatprep.subr.bf16.mxu0 0
        %425 = vmatpush2.bf16.msra.mxu0 0
        %426 = vmatprep.subr.bf16.mxu0 0
        %427 = vmatpush2.bf16.msra.mxu0 0
        %428 = vmatprep.subr.bf16.mxu0 0
        %429 = vmatpush2.bf16.msra.mxu0 0
        %430 = vmatprep.subr.bf16.mxu0 0
        %431 = vmatpush2.bf16.msra.mxu0 0
        %432 = vmatprep.subr.bf16.mxu0 0
        %433 = vmatpush2.bf16.msra.mxu0 0
        %434 = vmatprep.mubr.bf16.mxu0 0
        %435 = vmatmul.mubr.bf16.gmra.mxu0 %v379
        %v436 = vpop.f32.mrf.mxu0
        %v437 = vadd.f32 %v329, %v436
        %v438 = vpop.f32.mrf.mxu0
        %v439 = vpop.f32.mrf.mxu0
        %v440 = vadd.f32 %v329, %v439
        %v441 = vpop.f32.mrf.mxu0
        %442 = vmatprep.mubr.bf16.mxu0 0
        %443 = vmatmul.mubr.bf16.gmra.mxu0 %v382
        %v444 = vpop.f32.mrf.mxu0
        %v445 = vadd.f32 %v329, %v444
        %v446 = vpop.f32.mrf.mxu0
        %v447 = vpop.f32.mrf.mxu0
        %v448 = vadd.f32 %v329, %v447
        %v449 = vpop.f32.mrf.mxu0
        %450 = vmatprep.mubr.bf16.mxu0 0
        %451 = vmatmul.mubr.bf16.gmra.mxu0 %v385
        %v452 = vpop.f32.mrf.mxu0
        %v453 = vadd.f32 %v329, %v452
        %v454 = vpop.f32.mrf.mxu0
        %v455 = vpop.f32.mrf.mxu0
        %v456 = vadd.f32 %v329, %v455
        %v457 = vpop.f32.mrf.mxu0
        %458 = vmatprep.mubr.bf16.mxu0 0
        %459 = vmatmul.mubr.bf16.gmra.mxu0 %v388
        %v460 = vpop.f32.mrf.mxu0
        %v461 = vadd.f32 %v329, %v460
        %v462 = vpop.f32.mrf.mxu0
        %v463 = vpop.f32.mrf.mxu0
        %v464 = vadd.f32 %v329, %v463
        %v465 = vpop.f32.mrf.mxu0
        %466 = vmatprep.mubr.bf16.mxu0 0
        %467 = vmatmul.mubr.bf16.gmra.mxu0 %v391
        %v468 = vpop.f32.mrf.mxu0
        %v469 = vadd.f32 %v329, %v468
        %v470 = vpop.f32.mrf.mxu0
        %v471 = vpop.f32.mrf.mxu0
        %v472 = vadd.f32 %v329, %v471
        %v473 = vpop.f32.mrf.mxu0
        %474 = vmatprep.mubr.bf16.mxu0 0
        %475 = vmatmul.mubr.bf16.gmra.mxu0 %v394
        %v476 = vpop.f32.mrf.mxu0
        %v477 = vadd.f32 %v329, %v476
        %v478 = vpop.f32.mrf.mxu0
        %v479 = vpop.f32.mrf.mxu0
        %v480 = vadd.f32 %v329, %v479
        %v481 = vpop.f32.mrf.mxu0
        %482 = vmatprep.mubr.bf16.mxu0 0
        %483 = vmatmul.mubr.bf16.gmra.mxu0 %v397
        %v484 = vpop.f32.mrf.mxu0
        %v485 = vadd.f32 %v329, %v484
        %v486 = vpop.f32.mrf.mxu0
        %v487 = vpop.f32.mrf.mxu0
        %v488 = vadd.f32 %v329, %v487
        %v489 = vpop.f32.mrf.mxu0
        %490 = vmatprep.mubr.bf16.mxu0 0
        %491 = vmatmul.mubr.bf16.gmra.mxu0 %v400
        %v492 = vpop.f32.mrf.mxu0
        %v493 = vadd.f32 %v329, %v492
        %v494 = vpop.f32.mrf.mxu0
        %v495 = vpop.f32.mrf.mxu0
        %v496 = vadd.f32 %v329, %v495
        %v497 = vpop.f32.mrf.mxu0
        %498 = vdwg.mxu0
        %v499 = vmax.f32 %v437, 0.0
        %v500 = vmax.f32 %v440, 0.0
        %v501 = vmax.f32 %v445, 0.0
        %v502 = vmax.f32 %v448, 0.0
        %v503 = vmax.f32 %v453, 0.0
        %v504 = vmax.f32 %v456, 0.0
        %v505 = vmax.f32 %v461, 0.0
        %v506 = vmax.f32 %v464, 0.0
        %v507 = vmax.f32 %v469, 0.0
        %v508 = vmax.f32 %v472, 0.0
        %v509 = vmax.f32 %v477, 0.0
        %v510 = vmax.f32 %v480, 0.0
        %v511 = vmax.f32 %v485, 0.0
        %v512 = vmax.f32 %v488, 0.0
        %v513 = vmax.f32 %v493, 0.0
        %v514 = vmax.f32 %v496, 0.0
        %v515 = vpack.c.bf16 %v500, %v499
        %v516 = vpack.c.bf16 %v502, %v501
        %v517 = vpack.c.bf16 %v504, %v503
        %v518 = vpack.c.bf16 %v506, %v505
        %v519 = vpack.c.bf16 %v508, %v507
        %v520 = vpack.c.bf16 %v510, %v509
        %v521 = vpack.c.bf16 %v512, %v511
        %v522 = vpack.c.bf16 %v514, %v513
        %v523 = vld [vmem:[%s3] sm:$0xf]
        %v524 = vld [vmem:[%s3 + $0x4] sm:$0xf]
        %v525 = vld [vmem:[%s3 + $0x8] sm:$0xf]
        %v526 = vld [vmem:[%s3 + $0xc] sm:$0xf]
        %v527 = vld [vmem:[%s3 + $0x10] sm:$0xf]
        %v528 = vld [vmem:[%s3 + $0x14] sm:$0xf]
        %v529 = vld [vmem:[%s3 + $0x18] sm:$0xf]
        %v530 = vld [vmem:[%s3 + $0x1c] sm:$0xf]
        %v531 = vld [vmem:[%s4] sm:$0x1]
        %v533 = vlaneseq
        %v534 = vshrl.u32 %v533, 7
        %v535 = vsub.s32 0, %v534
        %v536 = vrot.slane %v531, %v535
        %v546 = vunpack.c.l.b16 %v523
        %v547 = vunpack.c.l.b16 %v524
        %v548 = vunpack.c.l.b16 %v525
        %v549 = vunpack.c.l.b16 %v526
        %v550 = vunpack.c.l.b16 %v527
        %v551 = vunpack.c.l.b16 %v528
        %v552 = vunpack.c.l.b16 %v529
        %v553 = vunpack.c.l.b16 %v530
        %v554 = vpack.c.b16 %v547, %v546
        %v555 = vpack.c.b16 %v549, %v548
        %v556 = vpack.c.b16 %v551, %v550
        %v557 = vpack.c.b16 %v553, %v552
        %vm562 = vcmask 523264
        %v564 = vsel %vm562, %v515, 0
        %v567 = vsel %vm562, %v516, 0
        %v570 = vsel %vm562, %v517, 0
        %v573 = vsel %vm562, %v518, 0
        %v576 = vsel %vm562, %v519, 0
        %v579 = vsel %vm562, %v520, 0
        %v582 = vsel %vm562, %v521, 0
        %v585 = vsel %vm562, %v522, 0
        %587 = vmatprep.subr.bf16.mxu0 0
        %588 = vmatpush1.bf16.msra.mxu0 0
        %589 = vmatprep.subr.bf16.mxu0 0
        %590 = vmatpush1.bf16.msra.mxu0 0
        %591 = vmatprep.subr.bf16.mxu0 0
        %592 = vmatpush1.bf16.msra.mxu0 0
        %593 = vmatprep.subr.bf16.mxu0 0
        %594 = vmatpush1.bf16.msra.mxu0 0
        %595 = vmatprep.subr.bf16.mxu0 0
        %596 = vmatpush1.bf16.msra.mxu0 %v557
        %597 = vmatprep.subr.bf16.mxu0 0
        %598 = vmatpush1.bf16.msra.mxu0 %v556
        %599 = vmatprep.subr.bf16.mxu0 0
        %600 = vmatpush1.bf16.msra.mxu0 %v555
        %601 = vmatprep.subr.bf16.mxu0 0
        %602 = vmatpush1.bf16.msra.mxu0 %v554
        %603 = vmatprep.subr.bf16.mxu0 0
        %604 = vmatpush2.bf16.msra.mxu0 0
        %605 = vmatprep.subr.bf16.mxu0 0
        %606 = vmatpush2.bf16.msra.mxu0 0
        %607 = vmatprep.subr.bf16.mxu0 0
        %608 = vmatpush2.bf16.msra.mxu0 0
        %609 = vmatprep.subr.bf16.mxu0 0
        %610 = vmatpush2.bf16.msra.mxu0 0
        %611 = vmatprep.subr.bf16.mxu0 0
        %612 = vmatpush2.bf16.msra.mxu0 0
        %613 = vmatprep.subr.bf16.mxu0 0
        %614 = vmatpush2.bf16.msra.mxu0 0
        %615 = vmatprep.subr.bf16.mxu0 0
        %616 = vmatpush2.bf16.msra.mxu0 0
        %617 = vmatprep.subr.bf16.mxu0 0
        %618 = vmatpush2.bf16.msra.mxu0 0
        %619 = vmatprep.mubr.bf16.mxu0 0
        %620 = vmatmul.mubr.bf16.gmra.mxu0 %v564
        %v621 = vpop.f32.mrf.mxu0
        %v622 = vadd.f32 %v536, %v621
        %v623 = vpop.f32.mrf.mxu0
        %v624 = vpop.f32.mrf.mxu0
        %v625 = vadd.f32 %v536, %v624
        %v626 = vpop.f32.mrf.mxu0
        %627 = vmatprep.mubr.bf16.mxu0 0
        %628 = vmatmul.mubr.bf16.gmra.mxu0 %v567
        %v629 = vpop.f32.mrf.mxu0
        %v630 = vadd.f32 %v536, %v629
        %v631 = vpop.f32.mrf.mxu0
        %v632 = vpop.f32.mrf.mxu0
        %v633 = vadd.f32 %v536, %v632
        %v634 = vpop.f32.mrf.mxu0
        %635 = vmatprep.mubr.bf16.mxu0 0
        %636 = vmatmul.mubr.bf16.gmra.mxu0 %v570
        %v637 = vpop.f32.mrf.mxu0
        %v638 = vadd.f32 %v536, %v637
        %v639 = vpop.f32.mrf.mxu0
        %v640 = vpop.f32.mrf.mxu0
        %v641 = vadd.f32 %v536, %v640
        %v642 = vpop.f32.mrf.mxu0
        %643 = vmatprep.mubr.bf16.mxu0 0
        %644 = vmatmul.mubr.bf16.gmra.mxu0 %v573
        %v645 = vpop.f32.mrf.mxu0
        %v646 = vadd.f32 %v536, %v645
        %v647 = vpop.f32.mrf.mxu0
        %v648 = vpop.f32.mrf.mxu0
        %v649 = vadd.f32 %v536, %v648
        %v650 = vpop.f32.mrf.mxu0
        %651 = vmatprep.mubr.bf16.mxu0 0
        %652 = vmatmul.mubr.bf16.gmra.mxu0 %v576
        %v653 = vpop.f32.mrf.mxu0
        %v654 = vadd.f32 %v536, %v653
        %v655 = vpop.f32.mrf.mxu0
        %v656 = vpop.f32.mrf.mxu0
        %v657 = vadd.f32 %v536, %v656
        %v658 = vpop.f32.mrf.mxu0
        %659 = vmatprep.mubr.bf16.mxu0 0
        %660 = vmatmul.mubr.bf16.gmra.mxu0 %v579
        %v661 = vpop.f32.mrf.mxu0
        %v662 = vadd.f32 %v536, %v661
        %v663 = vpop.f32.mrf.mxu0
        %v664 = vpop.f32.mrf.mxu0
        %v665 = vadd.f32 %v536, %v664
        %v666 = vpop.f32.mrf.mxu0
        %667 = vmatprep.mubr.bf16.mxu0 0
        %668 = vmatmul.mubr.bf16.gmra.mxu0 %v582
        %v669 = vpop.f32.mrf.mxu0
        %v670 = vadd.f32 %v536, %v669
        %v671 = vpop.f32.mrf.mxu0
        %v672 = vpop.f32.mrf.mxu0
        %v673 = vadd.f32 %v536, %v672
        %v674 = vpop.f32.mrf.mxu0
        %675 = vmatprep.mubr.bf16.mxu0 0
        %676 = vmatmul.mubr.bf16.gmra.mxu0 %v585
        %v677 = vpop.f32.mrf.mxu0
        %v678 = vadd.f32 %v536, %v677
        %v679 = vpop.f32.mrf.mxu0
        %v680 = vpop.f32.mrf.mxu0
        %v681 = vadd.f32 %v536, %v680
        %v682 = vpop.f32.mrf.mxu0
        %683 = vdwg.mxu0
        %v684 = vmax.f32 %v622, 0.0
        %v685 = vmax.f32 %v625, 0.0
        %v686 = vmax.f32 %v630, 0.0
        %v687 = vmax.f32 %v633, 0.0
        %v688 = vmax.f32 %v638, 0.0
        %v689 = vmax.f32 %v641, 0.0
        %v690 = vmax.f32 %v646, 0.0
        %v691 = vmax.f32 %v649, 0.0
        %v692 = vmax.f32 %v654, 0.0
        %v693 = vmax.f32 %v657, 0.0
        %v694 = vmax.f32 %v662, 0.0
        %v695 = vmax.f32 %v665, 0.0
        %v696 = vmax.f32 %v670, 0.0
        %v697 = vmax.f32 %v673, 0.0
        %v698 = vmax.f32 %v678, 0.0
        %v699 = vmax.f32 %v681, 0.0
        %v700 = vpack.c.bf16 %v685, %v684
        %v701 = vpack.c.bf16 %v687, %v686
        %v702 = vpack.c.bf16 %v689, %v688
        %v703 = vpack.c.bf16 %v691, %v690
        %v704 = vpack.c.bf16 %v693, %v692
        %v705 = vpack.c.bf16 %v695, %v694
        %v706 = vpack.c.bf16 %v697, %v696
        %v707 = vpack.c.bf16 %v699, %v698
        %v708 = vld [vmem:[#allocation2] sm:$0xff]
        %v709 = vld [vmem:[#allocation2 + $0x8] sm:$0xff]
        %v710 = vld [vmem:[#allocation2 + $0x10] sm:$0xff]
        %v711 = vld [vmem:[#allocation2 + $0x18] sm:$0xff]
        %v712 = vld [vmem:[#allocation2 + $0x20] sm:$0xff]
        %v713 = vld [vmem:[#allocation2 + $0x28] sm:$0xff]
        %v714 = vld [vmem:[#allocation2 + $0x30] sm:$0xff]
        %v715 = vld [vmem:[#allocation2 + $0x38] sm:$0xff]
        %v716 = vld [vmem:[#allocation2 + $0x40] sm:$0xff]
        %v717 = vld [vmem:[#allocation2 + $0x48] sm:$0xff]
        %v718 = vld [vmem:[#allocation2 + $0x50] sm:$0xff]
        %v719 = vld [vmem:[#allocation2 + $0x58] sm:$0xff]
        %v720 = vld [vmem:[#allocation2 + $0x60] sm:$0xff]
        %v721 = vld [vmem:[#allocation2 + $0x68] sm:$0xff]
        %v722 = vld [vmem:[#allocation2 + $0x70] sm:$0xff]
        %v723 = vld [vmem:[#allocation2 + $0x78] sm:$0xff]
        %v724 = vld [vmem:[#allocation2 + $0x80] sm:$0xff]
        %v725 = vld [vmem:[#allocation2 + $0x88] sm:$0xff]
        %v726 = vld [vmem:[#allocation2 + $0x90] sm:$0xff]
        %v727 = vld [vmem:[#allocation2 + $0x98] sm:$0xff]
        %v728 = vld [vmem:[#allocation2 + $0xa0] sm:$0xff]
        %v729 = vld [vmem:[#allocation2 + $0xa8] sm:$0xff]
        %v730 = vld [vmem:[#allocation2 + $0xb0] sm:$0xff]
        %v731 = vld [vmem:[#allocation2 + $0xb8] sm:$0xff]
        %v732 = vld [vmem:[#allocation2 + $0xc0] sm:$0xff]
        %v733 = vld [vmem:[#allocation2 + $0xc8] sm:$0xff]
        %v734 = vld [vmem:[#allocation2 + $0xd0] sm:$0xff]
        %v735 = vld [vmem:[#allocation2 + $0xd8] sm:$0xff]
        %v736 = vld [vmem:[#allocation2 + $0xe0] sm:$0xff]
        %v737 = vld [vmem:[#allocation2 + $0xe8] sm:$0xff]
        %v738 = vld [vmem:[#allocation2 + $0xf0] sm:$0xff]
        %v739 = vld [vmem:[#allocation2 + $0xf8] sm:$0xff]
        %v740 = vld [vmem:[#allocation2 + $0x100] sm:$0xff]
        %v741 = vld [vmem:[#allocation2 + $0x108] sm:$0xff]
        %v742 = vld [vmem:[#allocation2 + $0x110] sm:$0xff]
        %v743 = vld [vmem:[#allocation2 + $0x118] sm:$0xff]
        %v744 = vld [vmem:[#allocation2 + $0x120] sm:$0xff]
        %v745 = vld [vmem:[#allocation2 + $0x128] sm:$0xff]
        %v746 = vld [vmem:[#allocation2 + $0x130] sm:$0xff]
        %v747 = vld [vmem:[#allocation2 + $0x138] sm:$0xff]
        %v748 = vld [vmem:[#allocation2 + $0x140] sm:$0xff]
        %v749 = vld [vmem:[#allocation2 + $0x148] sm:$0xff]
        %v750 = vld [vmem:[#allocation2 + $0x150] sm:$0xff]
        %v751 = vld [vmem:[#allocation2 + $0x158] sm:$0xff]
        %v752 = vld [vmem:[#allocation2 + $0x160] sm:$0xff]
        %v753 = vld [vmem:[#allocation2 + $0x168] sm:$0xff]
        %v754 = vld [vmem:[#allocation2 + $0x170] sm:$0xff]
        %v755 = vld [vmem:[#allocation2 + $0x178] sm:$0xff]
        %v756 = vld [vmem:[#allocation2 + $0x180] sm:$0xff]
        %v757 = vld [vmem:[#allocation2 + $0x188] sm:$0xff]
        %v758 = vld [vmem:[#allocation2 + $0x190] sm:$0xff]
        %v759 = vld [vmem:[#allocation2 + $0x198] sm:$0xff]
        %v760 = vld [vmem:[#allocation2 + $0x1a0] sm:$0xff]
        %v761 = vld [vmem:[#allocation2 + $0x1a8] sm:$0xff]
        %v762 = vld [vmem:[#allocation2 + $0x1b0] sm:$0xff]
        %v763 = vld [vmem:[#allocation2 + $0x1b8] sm:$0xff]
        %v764 = vld [vmem:[#allocation2 + $0x1c0] sm:$0xff]
        %v765 = vld [vmem:[#allocation2 + $0x1c8] sm:$0xff]
        %v766 = vld [vmem:[#allocation2 + $0x1d0] sm:$0xff]
        %v767 = vld [vmem:[#allocation2 + $0x1d8] sm:$0xff]
        %v768 = vld [vmem:[#allocation2 + $0x1e0] sm:$0xff]
        %v769 = vld [vmem:[#allocation2 + $0x1e8] sm:$0xff]
        %v770 = vld [vmem:[#allocation2 + $0x1f0] sm:$0xff]
        %v771 = vld [vmem:[#allocation2 + $0x1f8] sm:$0xff]
        %v836 = vunpack.c.l.b16 %v708
        %v837 = vunpack.c.h.b16 %v708
        %v838 = vunpack.c.l.b16 %v709
        %v839 = vunpack.c.h.b16 %v709
        %v840 = vunpack.c.l.b16 %v710
        %v841 = vunpack.c.h.b16 %v710
        %v842 = vunpack.c.l.b16 %v711
        %v843 = vunpack.c.h.b16 %v711
        %v844 = vunpack.c.l.b16 %v712
        %v845 = vunpack.c.h.b16 %v712
        %v846 = vunpack.c.l.b16 %v713
        %v847 = vunpack.c.h.b16 %v713
        %v848 = vunpack.c.l.b16 %v714
        %v849 = vunpack.c.h.b16 %v714
        %v850 = vunpack.c.l.b16 %v715
        %v851 = vunpack.c.h.b16 %v715
        %v852 = vunpack.c.l.b16 %v716
        %v853 = vunpack.c.h.b16 %v716
        %v854 = vunpack.c.l.b16 %v717
        %v855 = vunpack.c.h.b16 %v717
        %v856 = vunpack.c.l.b16 %v718
        %v857 = vunpack.c.h.b16 %v718
        %v858 = vunpack.c.l.b16 %v719
        %v859 = vunpack.c.h.b16 %v719
        %v860 = vunpack.c.l.b16 %v720
        %v861 = vunpack.c.h.b16 %v720
        %v862 = vunpack.c.l.b16 %v721
        %v863 = vunpack.c.h.b16 %v721
        %v864 = vunpack.c.l.b16 %v722
        %v865 = vunpack.c.h.b16 %v722
        %v866 = vunpack.c.l.b16 %v723
        %v867 = vunpack.c.h.b16 %v723
        %v868 = vunpack.c.l.b16 %v724
        %v869 = vunpack.c.h.b16 %v724
        %v870 = vunpack.c.l.b16 %v725
        %v871 = vunpack.c.h.b16 %v725
        %v872 = vunpack.c.l.b16 %v726
        %v873 = vunpack.c.h.b16 %v726
        %v874 = vunpack.c.l.b16 %v727
        %v875 = vunpack.c.h.b16 %v727
        %v876 = vunpack.c.l.b16 %v728
        %v877 = vunpack.c.h.b16 %v728
        %v878 = vunpack.c.l.b16 %v729
        %v879 = vunpack.c.h.b16 %v729
        %v880 = vunpack.c.l.b16 %v730
        %v881 = vunpack.c.h.b16 %v730
        %v882 = vunpack.c.l.b16 %v731
        %v883 = vunpack.c.h.b16 %v731
        %v884 = vunpack.c.l.b16 %v732
        %v885 = vunpack.c.h.b16 %v732
        %v886 = vunpack.c.l.b16 %v733
        %v887 = vunpack.c.h.b16 %v733
        %v888 = vunpack.c.l.b16 %v734
        %v889 = vunpack.c.h.b16 %v734
        %v890 = vunpack.c.l.b16 %v735
        %v891 = vunpack.c.h.b16 %v735
        %v892 = vunpack.c.l.b16 %v736
        %v893 = vunpack.c.h.b16 %v736
        %v894 = vunpack.c.l.b16 %v737
        %v895 = vunpack.c.h.b16 %v737
        %v896 = vunpack.c.l.b16 %v738
        %v897 = vunpack.c.h.b16 %v738
        %v898 = vunpack.c.l.b16 %v739
        %v899 = vunpack.c.h.b16 %v739
        %v900 = vunpack.c.l.b16 %v740
        %v901 = vunpack.c.h.b16 %v740
        %v902 = vunpack.c.l.b16 %v741
        %v903 = vunpack.c.h.b16 %v741
        %v904 = vunpack.c.l.b16 %v742
        %v905 = vunpack.c.h.b16 %v742
        %v906 = vunpack.c.l.b16 %v743
        %v907 = vunpack.c.h.b16 %v743
        %v908 = vunpack.c.l.b16 %v744
        %v909 = vunpack.c.h.b16 %v744
        %v910 = vunpack.c.l.b16 %v745
        %v911 = vunpack.c.h.b16 %v745
        %v912 = vunpack.c.l.b16 %v746
        %v913 = vunpack.c.h.b16 %v746
        %v914 = vunpack.c.l.b16 %v747
        %v915 = vunpack.c.h.b16 %v747
        %v916 = vunpack.c.l.b16 %v748
        %v917 = vunpack.c.h.b16 %v748
        %v918 = vunpack.c.l.b16 %v749
        %v919 = vunpack.c.h.b16 %v749
        %v920 = vunpack.c.l.b16 %v750
        %v921 = vunpack.c.h.b16 %v750
        %v922 = vunpack.c.l.b16 %v751
        %v923 = vunpack.c.h.b16 %v751
        %v924 = vunpack.c.l.b16 %v752
        %v925 = vunpack.c.h.b16 %v752
        %v926 = vunpack.c.l.b16 %v753
        %v927 = vunpack.c.h.b16 %v753
        %v928 = vunpack.c.l.b16 %v754
        %v929 = vunpack.c.h.b16 %v754
        %v930 = vunpack.c.l.b16 %v755
        %v931 = vunpack.c.h.b16 %v755
        %v932 = vunpack.c.l.b16 %v756
        %v933 = vunpack.c.h.b16 %v756
        %v934 = vunpack.c.l.b16 %v757
        %v935 = vunpack.c.h.b16 %v757
        %v936 = vunpack.c.l.b16 %v758
        %v937 = vunpack.c.h.b16 %v758
        %v938 = vunpack.c.l.b16 %v759
        %v939 = vunpack.c.h.b16 %v759
        %v940 = vunpack.c.l.b16 %v760
        %v941 = vunpack.c.h.b16 %v760
        %v942 = vunpack.c.l.b16 %v761
        %v943 = vunpack.c.h.b16 %v761
        %v944 = vunpack.c.l.b16 %v762
        %v945 = vunpack.c.h.b16 %v762
        %v946 = vunpack.c.l.b16 %v763
        %v947 = vunpack.c.h.b16 %v763
        %v948 = vunpack.c.l.b16 %v764
        %v949 = vunpack.c.h.b16 %v764
        %v950 = vunpack.c.l.b16 %v765
        %v951 = vunpack.c.h.b16 %v765
        %v952 = vunpack.c.l.b16 %v766
        %v953 = vunpack.c.h.b16 %v766
        %v954 = vunpack.c.l.b16 %v767
        %v955 = vunpack.c.h.b16 %v767
        %v956 = vunpack.c.l.b16 %v768
        %v957 = vunpack.c.h.b16 %v768
        %v958 = vunpack.c.l.b16 %v769
        %v959 = vunpack.c.h.b16 %v769
        %v960 = vunpack.c.l.b16 %v770
        %v961 = vunpack.c.h.b16 %v770
        %v962 = vunpack.c.l.b16 %v771
        %v963 = vunpack.c.h.b16 %v771
        %v964 = vpack.c.b16 %v844, %v836
        %v965 = vpack.c.b16 %v845, %v837
        %v966 = vpack.c.b16 %v846, %v838
        %v967 = vpack.c.b16 %v847, %v839
        %v968 = vpack.c.b16 %v848, %v840
        %v969 = vpack.c.b16 %v849, %v841
        %v970 = vpack.c.b16 %v850, %v842
        %v971 = vpack.c.b16 %v851, %v843
        %v972 = vpack.c.b16 %v860, %v852
        %v973 = vpack.c.b16 %v861, %v853
        %v974 = vpack.c.b16 %v862, %v854
        %v975 = vpack.c.b16 %v863, %v855
        %v976 = vpack.c.b16 %v864, %v856
        %v977 = vpack.c.b16 %v865, %v857
        %v978 = vpack.c.b16 %v866, %v858
        %v979 = vpack.c.b16 %v867, %v859
        %v980 = vpack.c.b16 %v876, %v868
        %v981 = vpack.c.b16 %v877, %v869
        %v982 = vpack.c.b16 %v878, %v870
        %v983 = vpack.c.b16 %v879, %v871
        %v984 = vpack.c.b16 %v880, %v872
        %v985 = vpack.c.b16 %v881, %v873
        %v986 = vpack.c.b16 %v882, %v874
        %v987 = vpack.c.b16 %v883, %v875
        %v988 = vpack.c.b16 %v892, %v884
        %v989 = vpack.c.b16 %v893, %v885
        %v990 = vpack.c.b16 %v894, %v886
        %v991 = vpack.c.b16 %v895, %v887
        %v992 = vpack.c.b16 %v896, %v888
        %v993 = vpack.c.b16 %v897, %v889
        %v994 = vpack.c.b16 %v898, %v890
        %v995 = vpack.c.b16 %v899, %v891
        %v996 = vpack.c.b16 %v908, %v900
        %v997 = vpack.c.b16 %v909, %v901
        %v998 = vpack.c.b16 %v910, %v902
        %v999 = vpack.c.b16 %v911, %v903
        %v1000 = vpack.c.b16 %v912, %v904
        %v1001 = vpack.c.b16 %v913, %v905
        %v1002 = vpack.c.b16 %v914, %v906
        %v1003 = vpack.c.b16 %v915, %v907
        %v1004 = vpack.c.b16 %v924, %v916
        %v1005 = vpack.c.b16 %v925, %v917
        %v1006 = vpack.c.b16 %v926, %v918
        %v1007 = vpack.c.b16 %v927, %v919
        %v1008 = vpack.c.b16 %v928, %v920
        %v1009 = vpack.c.b16 %v929, %v921
        %v1010 = vpack.c.b16 %v930, %v922
        %v1011 = vpack.c.b16 %v931, %v923
        %v1012 = vpack.c.b16 %v940, %v932
        %v1013 = vpack.c.b16 %v941, %v933
        %v1014 = vpack.c.b16 %v942, %v934
        %v1015 = vpack.c.b16 %v943, %v935
        %v1016 = vpack.c.b16 %v944, %v936
        %v1017 = vpack.c.b16 %v945, %v937
        %v1018 = vpack.c.b16 %v946, %v938
        %v1019 = vpack.c.b16 %v947, %v939
        %v1020 = vpack.c.b16 %v956, %v948
        %v1021 = vpack.c.b16 %v957, %v949
        %v1022 = vpack.c.b16 %v958, %v950
        %v1023 = vpack.c.b16 %v959, %v951
        %v1024 = vpack.c.b16 %v960, %v952
        %v1025 = vpack.c.b16 %v961, %v953
        %v1026 = vpack.c.b16 %v962, %v954
        %v1027 = vpack.c.b16 %v963, %v955
        %1092 = vmatprep.subr.bf16.mxu0 %v1021
        %1093 = vmatpush1.bf16.msra.mxu0 %v1020
        %1094 = vmatprep.subr.bf16.mxu0 %v1013
        %1095 = vmatpush1.bf16.msra.mxu0 %v1012
        %1096 = vmatprep.subr.bf16.mxu0 %v1005
        %1097 = vmatpush1.bf16.msra.mxu0 %v1004
        %1098 = vmatprep.subr.bf16.mxu0 %v997
        %1099 = vmatpush1.bf16.msra.mxu0 %v996
        %1100 = vmatprep.subr.bf16.mxu0 %v989
        %1101 = vmatpush1.bf16.msra.mxu0 %v988
        %1102 = vmatprep.subr.bf16.mxu0 %v981
        %1103 = vmatpush1.bf16.msra.mxu0 %v980
        %1104 = vmatprep.subr.bf16.mxu0 %v973
        %1105 = vmatpush1.bf16.msra.mxu0 %v972
        %1106 = vmatprep.subr.bf16.mxu0 %v965
        %1107 = vmatpush1.bf16.msra.mxu0 %v964
        %1108 = vmatprep.subr.bf16.mxu0 0
        %1109 = vmatpush2.bf16.msra.mxu0 0
        %1110 = vmatprep.subr.bf16.mxu0 0
        %1111 = vmatpush2.bf16.msra.mxu0 0
        %1112 = vmatprep.subr.bf16.mxu0 0
        %1113 = vmatpush2.bf16.msra.mxu0 0
        %1114 = vmatprep.subr.bf16.mxu0 0
        %1115 = vmatpush2.bf16.msra.mxu0 0
        %1116 = vmatprep.subr.bf16.mxu0 0
        %1117 = vmatpush2.bf16.msra.mxu0 0
        %1118 = vmatprep.subr.bf16.mxu0 0
        %1119 = vmatpush2.bf16.msra.mxu0 0
        %1120 = vmatprep.subr.bf16.mxu0 0
        %1121 = vmatpush2.bf16.msra.mxu0 0
        %1122 = vmatprep.subr.bf16.mxu0 0
        %1123 = vmatpush2.bf16.msra.mxu0 0
        %1124 = vmatprep.mubr.bf16.mxu0 0
        %1125 = vmatmul.mubr.bf16.gmra.mxu0 %v700
        %v1126 = vpop.f32.mrf.mxu0
        %v1127 = vadd.f32 0.0, %v1126
        %v1128 = vpop.f32.mrf.mxu0
        %v1129 = vadd.f32 0.0, %v1128
        %v1130 = vpop.f32.mrf.mxu0
        %v1131 = vadd.f32 0.0, %v1130
        %v1132 = vpop.f32.mrf.mxu0
        %v1133 = vadd.f32 0.0, %v1132
        %1134 = vmatprep.mubr.bf16.mxu0 0
        %1135 = vmatmul.mubr.bf16.gmra.mxu0 %v701
        %v1136 = vpop.f32.mrf.mxu0
        %v1137 = vadd.f32 0.0, %v1136
        %v1138 = vpop.f32.mrf.mxu0
        %v1139 = vadd.f32 0.0, %v1138
        %v1140 = vpop.f32.mrf.mxu0
        %v1141 = vadd.f32 0.0, %v1140
        %v1142 = vpop.f32.mrf.mxu0
        %v1143 = vadd.f32 0.0, %v1142
        %1144 = vmatprep.mubr.bf16.mxu0 0
        %1145 = vmatmul.mubr.bf16.gmra.mxu0 %v702
        %v1146 = vpop.f32.mrf.mxu0
        %v1147 = vadd.f32 0.0, %v1146
        %v1148 = vpop.f32.mrf.mxu0
        %v1149 = vadd.f32 0.0, %v1148
        %v1150 = vpop.f32.mrf.mxu0
        %v1151 = vadd.f32 0.0, %v1150
        %v1152 = vpop.f32.mrf.mxu0
        %v1153 = vadd.f32 0.0, %v1152
        %1154 = vmatprep.mubr.bf16.mxu0 0
        %1155 = vmatmul.mubr.bf16.gmra.mxu0 %v703
        %v1156 = vpop.f32.mrf.mxu0
        %v1157 = vadd.f32 0.0, %v1156
        %v1158 = vpop.f32.mrf.mxu0
        %v1159 = vadd.f32 0.0, %v1158
        %v1160 = vpop.f32.mrf.mxu0
        %v1161 = vadd.f32 0.0, %v1160
        %v1162 = vpop.f32.mrf.mxu0
        %v1163 = vadd.f32 0.0, %v1162
        %1164 = vmatprep.mubr.bf16.mxu0 0
        %1165 = vmatmul.mubr.bf16.gmra.mxu0 %v704
        %v1166 = vpop.f32.mrf.mxu0
        %v1167 = vadd.f32 0.0, %v1166
        %v1168 = vpop.f32.mrf.mxu0
        %v1169 = vadd.f32 0.0, %v1168
        %v1170 = vpop.f32.mrf.mxu0
        %v1171 = vadd.f32 0.0, %v1170
        %v1172 = vpop.f32.mrf.mxu0
        %v1173 = vadd.f32 0.0, %v1172
        %1174 = vmatprep.mubr.bf16.mxu0 0
        %1175 = vmatmul.mubr.bf16.gmra.mxu0 %v705
        %v1176 = vpop.f32.mrf.mxu0
        %v1177 = vadd.f32 0.0, %v1176
        %v1178 = vpop.f32.mrf.mxu0
        %v1179 = vadd.f32 0.0, %v1178
        %v1180 = vpop.f32.mrf.mxu0
        %v1181 = vadd.f32 0.0, %v1180
        %v1182 = vpop.f32.mrf.mxu0
        %v1183 = vadd.f32 0.0, %v1182
        %1184 = vmatprep.mubr.bf16.mxu0 0
        %1185 = vmatmul.mubr.bf16.gmra.mxu0 %v706
        %v1186 = vpop.f32.mrf.mxu0
        %v1187 = vadd.f32 0.0, %v1186
        %v1188 = vpop.f32.mrf.mxu0
        %v1189 = vadd.f32 0.0, %v1188
        %v1190 = vpop.f32.mrf.mxu0
        %v1191 = vadd.f32 0.0, %v1190
        %v1192 = vpop.f32.mrf.mxu0
        %v1193 = vadd.f32 0.0, %v1192
        %1194 = vmatprep.mubr.bf16.mxu0 0
        %1195 = vmatmul.mubr.bf16.gmra.mxu0 %v707
        %v1196 = vpop.f32.mrf.mxu0
        %v1197 = vadd.f32 0.0, %v1196
        %v1198 = vpop.f32.mrf.mxu0
        %v1199 = vadd.f32 0.0, %v1198
        %v1200 = vpop.f32.mrf.mxu0
        %v1201 = vadd.f32 0.0, %v1200
        %v1202 = vpop.f32.mrf.mxu0
        %v1203 = vadd.f32 0.0, %v1202
        %1204 = vdwg.mxu0
        %1205 = vmatprep.subr.bf16.mxu0 %v1023
        %1206 = vmatpush1.bf16.msra.mxu0 %v1022
        %1207 = vmatprep.subr.bf16.mxu0 %v1015
        %1208 = vmatpush1.bf16.msra.mxu0 %v1014
        %1209 = vmatprep.subr.bf16.mxu0 %v1007
        %1210 = vmatpush1.bf16.msra.mxu0 %v1006
        %1211 = vmatprep.subr.bf16.mxu0 %v999
        %1212 = vmatpush1.bf16.msra.mxu0 %v998
        %1213 = vmatprep.subr.bf16.mxu0 %v991
        %1214 = vmatpush1.bf16.msra.mxu0 %v990
        %1215 = vmatprep.subr.bf16.mxu0 %v983
        %1216 = vmatpush1.bf16.msra.mxu0 %v982
        %1217 = vmatprep.subr.bf16.mxu0 %v975
        %1218 = vmatpush1.bf16.msra.mxu0 %v974
        %1219 = vmatprep.subr.bf16.mxu0 %v967
        %1220 = vmatpush1.bf16.msra.mxu0 %v966
        %1221 = vmatprep.subr.bf16.mxu0 0
        %1222 = vmatpush2.bf16.msra.mxu0 0
        %1223 = vmatprep.subr.bf16.mxu0 0
        %1224 = vmatpush2.bf16.msra.mxu0 0
        %1225 = vmatprep.subr.bf16.mxu0 0
        %1226 = vmatpush2.bf16.msra.mxu0 0
        %1227 = vmatprep.subr.bf16.mxu0 0
        %1228 = vmatpush2.bf16.msra.mxu0 0
        %1229 = vmatprep.subr.bf16.mxu0 0
        %1230 = vmatpush2.bf16.msra.mxu0 0
        %1231 = vmatprep.subr.bf16.mxu0 0
        %1232 = vmatpush2.bf16.msra.mxu0 0
        %1233 = vmatprep.subr.bf16.mxu0 0
        %1234 = vmatpush2.bf16.msra.mxu0 0
        %1235 = vmatprep.subr.bf16.mxu0 0
        %1236 = vmatpush2.bf16.msra.mxu0 0
        %1237 = vmatprep.mubr.bf16.mxu0 0
        %1238 = vmatmul.mubr.bf16.gmra.mxu0 %v700
        %v1239 = vpop.f32.mrf.mxu0
        %v1240 = vadd.f32 0.0, %v1239
        %v1241 = vpop.f32.mrf.mxu0
        %v1242 = vadd.f32 0.0, %v1241
        %v1243 = vpop.f32.mrf.mxu0
        %v1244 = vadd.f32 0.0, %v1243
        %v1245 = vpop.f32.mrf.mxu0
        %v1246 = vadd.f32 0.0, %v1245
        %1247 = vmatprep.mubr.bf16.mxu0 0
        %1248 = vmatmul.mubr.bf16.gmra.mxu0 %v701
        %v1249 = vpop.f32.mrf.mxu0
        %v1250 = vadd.f32 0.0, %v1249
        %v1251 = vpop.f32.mrf.mxu0
        %v1252 = vadd.f32 0.0, %v1251
        %v1253 = vpop.f32.mrf.mxu0
        %v1254 = vadd.f32 0.0, %v1253
        %v1255 = vpop.f32.mrf.mxu0
        %v1256 = vadd.f32 0.0, %v1255
        %1257 = vmatprep.mubr.bf16.mxu0 0
        %1258 = vmatmul.mubr.bf16.gmra.mxu0 %v702
        %v1259 = vpop.f32.mrf.mxu0
        %v1260 = vadd.f32 0.0, %v1259
        %v1261 = vpop.f32.mrf.mxu0
        %v1262 = vadd.f32 0.0, %v1261
        %v1263 = vpop.f32.mrf.mxu0
        %v1264 = vadd.f32 0.0, %v1263
        %v1265 = vpop.f32.mrf.mxu0
        %v1266 = vadd.f32 0.0, %v1265
        %1267 = vmatprep.mubr.bf16.mxu0 0
        %1268 = vmatmul.mubr.bf16.gmra.mxu0 %v703
        %v1269 = vpop.f32.mrf.mxu0
        %v1270 = vadd.f32 0.0, %v1269
        %v1271 = vpop.f32.mrf.mxu0
        %v1272 = vadd.f32 0.0, %v1271
        %v1273 = vpop.f32.mrf.mxu0
        %v1274 = vadd.f32 0.0, %v1273
        %v1275 = vpop.f32.mrf.mxu0
        %v1276 = vadd.f32 0.0, %v1275
        %1277 = vmatprep.mubr.bf16.mxu0 0
        %1278 = vmatmul.mubr.bf16.gmra.mxu0 %v704
        %v1279 = vpop.f32.mrf.mxu0
        %v1280 = vadd.f32 0.0, %v1279
        %v1281 = vpop.f32.mrf.mxu0
        %v1282 = vadd.f32 0.0, %v1281
        %v1283 = vpop.f32.mrf.mxu0
        %v1284 = vadd.f32 0.0, %v1283
        %v1285 = vpop.f32.mrf.mxu0
        %v1286 = vadd.f32 0.0, %v1285
        %1287 = vmatprep.mubr.bf16.mxu0 0
        %1288 = vmatmul.mubr.bf16.gmra.mxu0 %v705
        %v1289 = vpop.f32.mrf.mxu0
        %v1290 = vadd.f32 0.0, %v1289
        %v1291 = vpop.f32.mrf.mxu0
        %v1292 = vadd.f32 0.0, %v1291
        %v1293 = vpop.f32.mrf.mxu0
        %v1294 = vadd.f32 0.0, %v1293
        %v1295 = vpop.f32.mrf.mxu0
        %v1296 = vadd.f32 0.0, %v1295
        %1297 = vmatprep.mubr.bf16.mxu0 0
        %1298 = vmatmul.mubr.bf16.gmra.mxu0 %v706
        %v1299 = vpop.f32.mrf.mxu0
        %v1300 = vadd.f32 0.0, %v1299
        %v1301 = vpop.f32.mrf.mxu0
        %v1302 = vadd.f32 0.0, %v1301
        %v1303 = vpop.f32.mrf.mxu0
        %v1304 = vadd.f32 0.0, %v1303
        %v1305 = vpop.f32.mrf.mxu0
        %v1306 = vadd.f32 0.0, %v1305
        %1307 = vmatprep.mubr.bf16.mxu0 0
        %1308 = vmatmul.mubr.bf16.gmra.mxu0 %v707
        %v1309 = vpop.f32.mrf.mxu0
        %v1310 = vadd.f32 0.0, %v1309
        %v1311 = vpop.f32.mrf.mxu0
        %v1312 = vadd.f32 0.0, %v1311
        %v1313 = vpop.f32.mrf.mxu0
        %v1314 = vadd.f32 0.0, %v1313
        %v1315 = vpop.f32.mrf.mxu0
        %v1316 = vadd.f32 0.0, %v1315
        %1317 = vdwg.mxu0
        %1318 = vmatprep.subr.bf16.mxu0 %v1025
        %1319 = vmatpush1.bf16.msra.mxu0 %v1024
        %1320 = vmatprep.subr.bf16.mxu0 %v1017
        %1321 = vmatpush1.bf16.msra.mxu0 %v1016
        %1322 = vmatprep.subr.bf16.mxu0 %v1009
        %1323 = vmatpush1.bf16.msra.mxu0 %v1008
        %1324 = vmatprep.subr.bf16.mxu0 %v1001
        %1325 = vmatpush1.bf16.msra.mxu0 %v1000
        %1326 = vmatprep.subr.bf16.mxu0 %v993
        %1327 = vmatpush1.bf16.msra.mxu0 %v992
        %1328 = vmatprep.subr.bf16.mxu0 %v985
        %1329 = vmatpush1.bf16.msra.mxu0 %v984
        %1330 = vmatprep.subr.bf16.mxu0 %v977
        %1331 = vmatpush1.bf16.msra.mxu0 %v976
        %1332 = vmatprep.subr.bf16.mxu0 %v969
        %1333 = vmatpush1.bf16.msra.mxu0 %v968
        %1334 = vmatprep.subr.bf16.mxu0 0
        %1335 = vmatpush2.bf16.msra.mxu0 0
        %1336 = vmatprep.subr.bf16.mxu0 0
        %1337 = vmatpush2.bf16.msra.mxu0 0
        %1338 = vmatprep.subr.bf16.mxu0 0
        %1339 = vmatpush2.bf16.msra.mxu0 0
        %1340 = vmatprep.subr.bf16.mxu0 0
        %1341 = vmatpush2.bf16.msra.mxu0 0
        %1342 = vmatprep.subr.bf16.mxu0 0
        %1343 = vmatpush2.bf16.msra.mxu0 0
        %1344 = vmatprep.subr.bf16.mxu0 0
        %1345 = vmatpush2.bf16.msra.mxu0 0
        %1346 = vmatprep.subr.bf16.mxu0 0
        %1347 = vmatpush2.bf16.msra.mxu0 0
        %1348 = vmatprep.subr.bf16.mxu0 0
        %1349 = vmatpush2.bf16.msra.mxu0 0
        %1350 = vmatprep.mubr.bf16.mxu0 0
        %1351 = vmatmul.mubr.bf16.gmra.mxu0 %v700
        %v1352 = vpop.f32.mrf.mxu0
        %v1353 = vadd.f32 0.0, %v1352
        %v1354 = vpop.f32.mrf.mxu0
        %v1355 = vadd.f32 0.0, %v1354
        %v1356 = vpop.f32.mrf.mxu0
        %v1357 = vadd.f32 0.0, %v1356
        %v1358 = vpop.f32.mrf.mxu0
        %v1359 = vadd.f32 0.0, %v1358
        %1360 = vmatprep.mubr.bf16.mxu0 0
        %1361 = vmatmul.mubr.bf16.gmra.mxu0 %v701
        %v1362 = vpop.f32.mrf.mxu0
        %v1363 = vadd.f32 0.0, %v1362
        %v1364 = vpop.f32.mrf.mxu0
        %v1365 = vadd.f32 0.0, %v1364
        %v1366 = vpop.f32.mrf.mxu0
        %v1367 = vadd.f32 0.0, %v1366
        %v1368 = vpop.f32.mrf.mxu0
        %v1369 = vadd.f32 0.0, %v1368
        %1370 = vmatprep.mubr.bf16.mxu0 0
        %1371 = vmatmul.mubr.bf16.gmra.mxu0 %v702
        %v1372 = vpop.f32.mrf.mxu0
        %v1373 = vadd.f32 0.0, %v1372
        %v1374 = vpop.f32.mrf.mxu0
        %v1375 = vadd.f32 0.0, %v1374
        %v1376 = vpop.f32.mrf.mxu0
        %v1377 = vadd.f32 0.0, %v1376
        %v1378 = vpop.f32.mrf.mxu0
        %v1379 = vadd.f32 0.0, %v1378
        %1380 = vmatprep.mubr.bf16.mxu0 0
        %1381 = vmatmul.mubr.bf16.gmra.mxu0 %v703
        %v1382 = vpop.f32.mrf.mxu0
        %v1383 = vadd.f32 0.0, %v1382
        %v1384 = vpop.f32.mrf.mxu0
        %v1385 = vadd.f32 0.0, %v1384
        %v1386 = vpop.f32.mrf.mxu0
        %v1387 = vadd.f32 0.0, %v1386
        %v1388 = vpop.f32.mrf.mxu0
        %v1389 = vadd.f32 0.0, %v1388
        %1390 = vmatprep.mubr.bf16.mxu0 0
        %1391 = vmatmul.mubr.bf16.gmra.mxu0 %v704
        %v1392 = vpop.f32.mrf.mxu0
        %v1393 = vadd.f32 0.0, %v1392
        %v1394 = vpop.f32.mrf.mxu0
        %v1395 = vadd.f32 0.0, %v1394
        %v1396 = vpop.f32.mrf.mxu0
        %v1397 = vadd.f32 0.0, %v1396
        %v1398 = vpop.f32.mrf.mxu0
        %v1399 = vadd.f32 0.0, %v1398
        %1400 = vmatprep.mubr.bf16.mxu0 0
        %1401 = vmatmul.mubr.bf16.gmra.mxu0 %v705
        %v1402 = vpop.f32.mrf.mxu0
        %v1403 = vadd.f32 0.0, %v1402
        %v1404 = vpop.f32.mrf.mxu0
        %v1405 = vadd.f32 0.0, %v1404
        %v1406 = vpop.f32.mrf.mxu0
        %v1407 = vadd.f32 0.0, %v1406
        %v1408 = vpop.f32.mrf.mxu0
        %v1409 = vadd.f32 0.0, %v1408
        %1410 = vmatprep.mubr.bf16.mxu0 0
        %1411 = vmatmul.mubr.bf16.gmra.mxu0 %v706
        %v1412 = vpop.f32.mrf.mxu0
        %v1413 = vadd.f32 0.0, %v1412
        %v1414 = vpop.f32.mrf.mxu0
        %v1415 = vadd.f32 0.0, %v1414
        %v1416 = vpop.f32.mrf.mxu0
        %v1417 = vadd.f32 0.0, %v1416
        %v1418 = vpop.f32.mrf.mxu0
        %v1419 = vadd.f32 0.0, %v1418
        %1420 = vmatprep.mubr.bf16.mxu0 0
        %1421 = vmatmul.mubr.bf16.gmra.mxu0 %v707
        %v1422 = vpop.f32.mrf.mxu0
        %v1423 = vadd.f32 0.0, %v1422
        %v1424 = vpop.f32.mrf.mxu0
        %v1425 = vadd.f32 0.0, %v1424
        %v1426 = vpop.f32.mrf.mxu0
        %v1427 = vadd.f32 0.0, %v1426
        %v1428 = vpop.f32.mrf.mxu0
        %v1429 = vadd.f32 0.0, %v1428
        %1430 = vdwg.mxu0
        %1431 = vmatprep.subr.bf16.mxu0 %v1027
        %1432 = vmatpush1.bf16.msra.mxu0 %v1026
        %1433 = vmatprep.subr.bf16.mxu0 %v1019
        %1434 = vmatpush1.bf16.msra.mxu0 %v1018
        %1435 = vmatprep.subr.bf16.mxu0 %v1011
        %1436 = vmatpush1.bf16.msra.mxu0 %v1010
        %1437 = vmatprep.subr.bf16.mxu0 %v1003
        %1438 = vmatpush1.bf16.msra.mxu0 %v1002
        %1439 = vmatprep.subr.bf16.mxu0 %v995
        %1440 = vmatpush1.bf16.msra.mxu0 %v994
        %1441 = vmatprep.subr.bf16.mxu0 %v987
        %1442 = vmatpush1.bf16.msra.mxu0 %v986
        %1443 = vmatprep.subr.bf16.mxu0 %v979
        %1444 = vmatpush1.bf16.msra.mxu0 %v978
        %1445 = vmatprep.subr.bf16.mxu0 %v971
        %1446 = vmatpush1.bf16.msra.mxu0 %v970
        %1447 = vmatprep.subr.bf16.mxu0 0
        %1448 = vmatpush2.bf16.msra.mxu0 0
        %1449 = vmatprep.subr.bf16.mxu0 0
        %1450 = vmatpush2.bf16.msra.mxu0 0
        %1451 = vmatprep.subr.bf16.mxu0 0
        %1452 = vmatpush2.bf16.msra.mxu0 0
        %1453 = vmatprep.subr.bf16.mxu0 0
        %1454 = vmatpush2.bf16.msra.mxu0 0
        %1455 = vmatprep.subr.bf16.mxu0 0
        %1456 = vmatpush2.bf16.msra.mxu0 0
        %1457 = vmatprep.subr.bf16.mxu0 0
        %1458 = vmatpush2.bf16.msra.mxu0 0
        %1459 = vmatprep.subr.bf16.mxu0 0
        %1460 = vmatpush2.bf16.msra.mxu0 0
        %1461 = vmatprep.subr.bf16.mxu0 0
        %1462 = vmatpush2.bf16.msra.mxu0 0
        %1463 = vmatprep.mubr.bf16.mxu0 0
        %1464 = vmatmul.mubr.bf16.gmra.mxu0 %v700
        %v1465 = vpop.f32.mrf.mxu0
        %v1466 = vadd.f32 0.0, %v1465
        %v1467 = vpop.f32.mrf.mxu0
        %v1468 = vadd.f32 0.0, %v1467
        %v1469 = vpop.f32.mrf.mxu0
        %v1470 = vadd.f32 0.0, %v1469
        %v1471 = vpop.f32.mrf.mxu0
        %v1472 = vadd.f32 0.0, %v1471
        %1473 = vmatprep.mubr.bf16.mxu0 0
        %1474 = vmatmul.mubr.bf16.gmra.mxu0 %v701
        %v1475 = vpop.f32.mrf.mxu0
        %v1476 = vadd.f32 0.0, %v1475
        %v1477 = vpop.f32.mrf.mxu0
        %v1478 = vadd.f32 0.0, %v1477
        %v1479 = vpop.f32.mrf.mxu0
        %v1480 = vadd.f32 0.0, %v1479
        %v1481 = vpop.f32.mrf.mxu0
        %v1482 = vadd.f32 0.0, %v1481
        %1483 = vmatprep.mubr.bf16.mxu0 0
        %1484 = vmatmul.mubr.bf16.gmra.mxu0 %v702
        %v1485 = vpop.f32.mrf.mxu0
        %v1486 = vadd.f32 0.0, %v1485
        %v1487 = vpop.f32.mrf.mxu0
        %v1488 = vadd.f32 0.0, %v1487
        %v1489 = vpop.f32.mrf.mxu0
        %v1490 = vadd.f32 0.0, %v1489
        %v1491 = vpop.f32.mrf.mxu0
        %v1492 = vadd.f32 0.0, %v1491
        %1493 = vmatprep.mubr.bf16.mxu0 0
        %1494 = vmatmul.mubr.bf16.gmra.mxu0 %v703
        %v1495 = vpop.f32.mrf.mxu0
        %v1496 = vadd.f32 0.0, %v1495
        %v1497 = vpop.f32.mrf.mxu0
        %v1498 = vadd.f32 0.0, %v1497
        %v1499 = vpop.f32.mrf.mxu0
        %v1500 = vadd.f32 0.0, %v1499
        %v1501 = vpop.f32.mrf.mxu0
        %v1502 = vadd.f32 0.0, %v1501
        %1503 = vmatprep.mubr.bf16.mxu0 0
        %1504 = vmatmul.mubr.bf16.gmra.mxu0 %v704
        %v1505 = vpop.f32.mrf.mxu0
        %v1506 = vadd.f32 0.0, %v1505
        %v1507 = vpop.f32.mrf.mxu0
        %v1508 = vadd.f32 0.0, %v1507
        %v1509 = vpop.f32.mrf.mxu0
        %v1510 = vadd.f32 0.0, %v1509
        %v1511 = vpop.f32.mrf.mxu0
        %v1512 = vadd.f32 0.0, %v1511
        %1513 = vmatprep.mubr.bf16.mxu0 0
        %1514 = vmatmul.mubr.bf16.gmra.mxu0 %v705
        %v1515 = vpop.f32.mrf.mxu0
        %v1516 = vadd.f32 0.0, %v1515
        %v1517 = vpop.f32.mrf.mxu0
        %v1518 = vadd.f32 0.0, %v1517
        %v1519 = vpop.f32.mrf.mxu0
        %v1520 = vadd.f32 0.0, %v1519
        %v1521 = vpop.f32.mrf.mxu0
        %v1522 = vadd.f32 0.0, %v1521
        %1523 = vmatprep.mubr.bf16.mxu0 0
        %1524 = vmatmul.mubr.bf16.gmra.mxu0 %v706
        %v1525 = vpop.f32.mrf.mxu0
        %v1526 = vadd.f32 0.0, %v1525
        %v1527 = vpop.f32.mrf.mxu0
        %v1528 = vadd.f32 0.0, %v1527
        %v1529 = vpop.f32.mrf.mxu0
        %v1530 = vadd.f32 0.0, %v1529
        %v1531 = vpop.f32.mrf.mxu0
        %v1532 = vadd.f32 0.0, %v1531
        %1533 = vmatprep.mubr.bf16.mxu0 0
        %1534 = vmatmul.mubr.bf16.gmra.mxu0 %v707
        %v1535 = vpop.f32.mrf.mxu0
        %v1536 = vadd.f32 0.0, %v1535
        %v1537 = vpop.f32.mrf.mxu0
        %v1538 = vadd.f32 0.0, %v1537
        %v1539 = vpop.f32.mrf.mxu0
        %v1540 = vadd.f32 0.0, %v1539
        %v1541 = vpop.f32.mrf.mxu0
        %v1542 = vadd.f32 0.0, %v1541
        %1543 = vdwg.mxu0
        %v1544 = vmax.f32 %v1127, %v1131
        %v1545 = vmax.f32 %v1544, %v1137
        %v1546 = vmax.f32 %v1545, %v1141
        %v1547 = vmax.f32 %v1546, %v1147
        %v1548 = vmax.f32 %v1547, %v1151
        %v1549 = vmax.f32 %v1548, %v1157
        %v1550 = vmax.f32 %v1549, %v1161
        %v1551 = vmax.f32 %v1550, %v1167
        %v1552 = vmax.f32 %v1551, %v1171
        %v1553 = vmax.f32 %v1552, %v1177
        %v1554 = vmax.f32 %v1553, %v1181
        %v1555 = vmax.f32 %v1554, %v1187
        %v1556 = vmax.f32 %v1555, %v1191
        %v1557 = vmax.f32 %v1556, %v1197
        %v1558 = vmax.f32 %v1557, %v1201
        %v1559 = vmax.f32 %v1129, %v1133
        %v1560 = vmax.f32 %v1559, %v1139
        %v1561 = vmax.f32 %v1560, %v1143
        %v1562 = vmax.f32 %v1561, %v1149
        %v1563 = vmax.f32 %v1562, %v1153
        %v1564 = vmax.f32 %v1563, %v1159
        %v1565 = vmax.f32 %v1564, %v1163
        %v1566 = vmax.f32 %v1565, %v1169
        %v1567 = vmax.f32 %v1566, %v1173
        %v1568 = vmax.f32 %v1567, %v1179
        %v1569 = vmax.f32 %v1568, %v1183
        %v1570 = vmax.f32 %v1569, %v1189
        %v1571 = vmax.f32 %v1570, %v1193
        %v1572 = vmax.f32 %v1571, %v1199
        %v1573 = vmax.f32 %v1572, %v1203
        %v1574 = vmax.f32 %v1240, %v1244
        %v1575 = vmax.f32 %v1574, %v1250
        %v1576 = vmax.f32 %v1575, %v1254
        %v1577 = vmax.f32 %v1576, %v1260
        %v1578 = vmax.f32 %v1577, %v1264
        %v1579 = vmax.f32 %v1578, %v1270
        %v1580 = vmax.f32 %v1579, %v1274
        %v1581 = vmax.f32 %v1580, %v1280
        %v1582 = vmax.f32 %v1581, %v1284
        %v1583 = vmax.f32 %v1582, %v1290
        %v1584 = vmax.f32 %v1583, %v1294
        %v1585 = vmax.f32 %v1584, %v1300
        %v1586 = vmax.f32 %v1585, %v1304
        %v1587 = vmax.f32 %v1586, %v1310
        %v1588 = vmax.f32 %v1587, %v1314
        %v1589 = vmax.f32 %v1242, %v1246
        %v1590 = vmax.f32 %v1589, %v1252
        %v1591 = vmax.f32 %v1590, %v1256
        %v1592 = vmax.f32 %v1591, %v1262
        %v1593 = vmax.f32 %v1592, %v1266
        %v1594 = vmax.f32 %v1593, %v1272
        %v1595 = vmax.f32 %v1594, %v1276
        %v1596 = vmax.f32 %v1595, %v1282
        %v1597 = vmax.f32 %v1596, %v1286
        %v1598 = vmax.f32 %v1597, %v1292
        %v1599 = vmax.f32 %v1598, %v1296
        %v1600 = vmax.f32 %v1599, %v1302
        %v1601 = vmax.f32 %v1600, %v1306
        %v1602 = vmax.f32 %v1601, %v1312
        %v1603 = vmax.f32 %v1602, %v1316
        %v1604 = vmax.f32 %v1353, %v1357
        %v1605 = vmax.f32 %v1604, %v1363
        %v1606 = vmax.f32 %v1605, %v1367
        %v1607 = vmax.f32 %v1606, %v1373
        %v1608 = vmax.f32 %v1607, %v1377
        %v1609 = vmax.f32 %v1608, %v1383
        %v1610 = vmax.f32 %v1609, %v1387
        %v1611 = vmax.f32 %v1610, %v1393
        %v1612 = vmax.f32 %v1611, %v1397
        %v1613 = vmax.f32 %v1612, %v1403
        %v1614 = vmax.f32 %v1613, %v1407
        %v1615 = vmax.f32 %v1614, %v1413
        %v1616 = vmax.f32 %v1615, %v1417
        %v1617 = vmax.f32 %v1616, %v1423
        %v1618 = vmax.f32 %v1617, %v1427
        %v1619 = vmax.f32 %v1355, %v1359
        %v1620 = vmax.f32 %v1619, %v1365
        %v1621 = vmax.f32 %v1620, %v1369
        %v1622 = vmax.f32 %v1621, %v1375
        %v1623 = vmax.f32 %v1622, %v1379
        %v1624 = vmax.f32 %v1623, %v1385
        %v1625 = vmax.f32 %v1624, %v1389
        %v1626 = vmax.f32 %v1625, %v1395
        %v1627 = vmax.f32 %v1626, %v1399
        %v1628 = vmax.f32 %v1627, %v1405
        %v1629 = vmax.f32 %v1628, %v1409
        %v1630 = vmax.f32 %v1629, %v1415
        %v1631 = vmax.f32 %v1630, %v1419
        %v1632 = vmax.f32 %v1631, %v1425
        %v1633 = vmax.f32 %v1632, %v1429
        %v1634 = vmax.f32 %v1466, %v1470
        %v1635 = vmax.f32 %v1634, %v1476
        %v1636 = vmax.f32 %v1635, %v1480
        %v1637 = vmax.f32 %v1636, %v1486
        %v1638 = vmax.f32 %v1637, %v1490
        %v1639 = vmax.f32 %v1638, %v1496
        %v1640 = vmax.f32 %v1639, %v1500
        %v1641 = vmax.f32 %v1640, %v1506
        %v1642 = vmax.f32 %v1641, %v1510
        %v1643 = vmax.f32 %v1642, %v1516
        %v1644 = vmax.f32 %v1643, %v1520
        %v1645 = vmax.f32 %v1644, %v1526
        %v1646 = vmax.f32 %v1645, %v1530
        %v1647 = vmax.f32 %v1646, %v1536
        %v1648 = vmax.f32 %v1647, %v1540
        %v1649 = vmax.f32 %v1468, %v1472
        %v1650 = vmax.f32 %v1649, %v1478
        %v1651 = vmax.f32 %v1650, %v1482
        %v1652 = vmax.f32 %v1651, %v1488
        %v1653 = vmax.f32 %v1652, %v1492
        %v1654 = vmax.f32 %v1653, %v1498
        %v1655 = vmax.f32 %v1654, %v1502
        %v1656 = vmax.f32 %v1655, %v1508
        %v1657 = vmax.f32 %v1656, %v1512
        %v1658 = vmax.f32 %v1657, %v1518
        %v1659 = vmax.f32 %v1658, %v1522
        %v1660 = vmax.f32 %v1659, %v1528
        %v1661 = vmax.f32 %v1660, %v1532
        %v1662 = vmax.f32 %v1661, %v1538
        %v1663 = vmax.f32 %v1662, %v1542
        %v1664 = vld [vmem:[%s282] sm:$0xff]
        %v1665 = vld [vmem:[%s282 + $0x8] sm:$0xff]
        %v1666 = vld [vmem:[%s282 + $0x10] sm:$0xff]
        %v1667 = vld [vmem:[%s282 + $0x18] sm:$0xff]
        %v1668 = vld [vmem:[%s282 + $0x20] sm:$0xff]
        %v1669 = vld [vmem:[%s282 + $0x28] sm:$0xff]
        %v1670 = vld [vmem:[%s282 + $0x30] sm:$0xff]
        %v1671 = vld [vmem:[%s282 + $0x38] sm:$0xff]
        %v1672 = vmax.f32 %v1664, %v1558
        %v1673 = vmax.f32 %v1665, %v1573
        %v1674 = vmax.f32 %v1666, %v1588
        %v1675 = vmax.f32 %v1667, %v1603
        %v1676 = vmax.f32 %v1668, %v1618
        %v1677 = vmax.f32 %v1669, %v1633
        %v1678 = vmax.f32 %v1670, %v1648
        %v1679 = vmax.f32 %v1671, %v1663
        %1680 = vst [vmem:[%s282] sm:$0xff] %v1672
        %1681 = vst [vmem:[%s282 + $0x8] sm:$0xff] %v1673
        %1682 = vst [vmem:[%s282 + $0x10] sm:$0xff] %v1674
        %1683 = vst [vmem:[%s282 + $0x18] sm:$0xff] %v1675
        %1684 = vst [vmem:[%s282 + $0x20] sm:$0xff] %v1676
        %1685 = vst [vmem:[%s282 + $0x28] sm:$0xff] %v1677
        %1686 = vst [vmem:[%s282 + $0x30] sm:$0xff] %v1678
        %1687 = vst [vmem:[%s282 + $0x38] sm:$0xff] %v1679
        %s1688 = sand.u32 %s174, 1
        %s1689 = scalar_lea.sflag [#allocation4], %s1688
        %s1690 = sand.u32 %s174, 1
        %s1691 = smul.addr %s1690, 64
        %s1692 = scalar_lea.vmem [#allocation5], %s1691
        // Predicated region
        $region53: #{tpu_custom_call.1} parent=43 // pred_check
          %p1693 = pneg %p184
        $region54: #{tpu_custom_call.1} parent=43 // pred_check_branch
          %1695 = sbr.rel (%p1693) target = $region56
        $region55: #{tpu_custom_call.1} parent=43 // pred_region
          %s1697 = ssub.s32 1024, 1024
          %1698 = vsyncadd %s1689, %s1697
          %s1699 = smul.addr %s25, 8
          %s1700 = smul.addr %s1699, 128
          %s1701 = scalar_lea.hbm %s6, %s1700
          %s1703 = sshll.u32 %s1692, 4
          %s1704 = int_to_ptr.vmem [resolvable:$true] %s1703
          %1706 = dma.vmem_to_hbm [thread:$0]  %s1704, 1024, %s1701, %s1689
        $region56: #{tpu_custom_call.1} parent=43 // pred_fallthru
          _
      $region44: #{tpu_custom_call.1} parent=5 // pred_fallthru
        _
      %p1707 = scmp.le.s32.totalorder 2, %s16
      // Predicated region
      $region57: #{tpu_custom_call.1} parent=5 // pred_check
        %p1708 = pneg %p1707
      $region58: #{tpu_custom_call.1} parent=5 // pred_check_branch
        %1710 = sbr.rel (%p1708) target = $region60
      $region59: #{tpu_custom_call.1} parent=5 // pred_region
        %s1711 = ssub.s32 %s16, 2
        // Predicated region
        $region61: #{tpu_custom_call.1} parent=59 // pred_check
          %p1712 = pneg %p190
        $region62: #{tpu_custom_call.1} parent=59 // pred_check_branch
          %1714 = sbr.rel (%p1712) target = $region64
        $region63: #{tpu_custom_call.1} parent=59 // pred_region
          %s1715 = sand.u32 %s175, 1
          %s1716 = scalar_lea.sflag [#allocation4], %s1715
          %s1717 = sand.u32 %s175, 1
          %s1718 = smul.addr %s1717, 64
          %s1719 = scalar_lea.vmem [#allocation5], %s1718
          %1720 = dma.done %s1716, 1024
        $region64: #{tpu_custom_call.1} parent=59 // pred_fallthru
          _
      $region60: #{tpu_custom_call.1} parent=5 // pred_fallthru
        _
    $region6: #{tpu_custom_call.1} parent=1 // loop_footer
      %s20 = sadd.s32 1, %s16
    $region7: #{tpu_custom_call.1} parent=1 // loop_footer_branch
      %15 = sbr.rel target = $region3
    $region8: #{tpu_custom_call.1} parent=1 // loop_exit
      _
    %1721 = vsyncpa [#allocation3], 1
    %s1722 = scalar_lea.sflag [#allocation3], 1
    %1723 = vsyncpa %s1722, 1
    %1724 = vsyncpa [#allocation4], 1
    %s1725 = scalar_lea.sflag [#allocation4], 1
    %1726 = vsyncpa %s1725, 1

</llo_original>
